<compile_context>
chip_gen: v7x
topology: tpu7x:2x2x1
jax: 0.10.0
libtpu: 0.0.40
codegen_flags: <defaults>
</compile_context>

<pallas_src>
import functools

import jax
import jax.numpy as jnp
from jax.experimental import pallas as pl
from jax.experimental.pallas import tpu as pltpu


# ------------------------------ fused Pallas kernel ------------------------------


def cnn_lstm_kernel(x_ref, w1_ref, b1_ref, w2_ref, b2_ref,
                    wcat_ref, bl_ref, wo_ref, bo_ref,
                    out_ref, head_ref,
                    pad1_scr, pad2_scr, *, K, pool, T):
    # x_ref:    (bn, L, Cin)   channels-last input block (one batch tile)
    # w1_ref:   (K*Cin, F1)    im2col-flattened conv1 weight;  b1_ref: (1, 1, F1)
    # w2_ref:   (K*F1, F2)     im2col-flattened conv2 weight;  b2_ref: (1, 1, F2)
    # wcat_ref: (F2+H, 4H)     [W_ih; W_hh] concatenated on the contraction axis
    # bl_ref:   (1, 4H)        b_ih + b_hh (gate order i,f,g,o)
    # wo_ref:   (H, O)   bo_ref: (1, O)
    # out_ref:  (bn, T*H)      all per-step hidden states, one lane-dense store
    # head_ref: (bn, O)        Linear(last hidden state)
    # pad{1,2}_scr: (bn, L+K-1, C) zero-halo scratch for 'same' padding (in-kernel)
    bn, L, _ = x_ref.shape
    H = wo_ref.shape[0]
    pad_l = (K - 1) // 2                      # PyTorch padding='same' split (left = total//2)
    mm_dtype = wcat_ref.dtype                 # f32 or bf16 matmul operands

    def conv_same(x, pad_scr, w_flat, b):
        # x: (bn, L, C) value;  pad_scr: (bn, L+K-1, C) scratch;  w_flat: (K*C, Cout)
        C = x.shape[-1]
        Cout = w_flat.shape[-1]
        # zero-halo 'same' padding entirely inside VMEM
        pad_scr[...] = jnp.zeros_like(pad_scr)
        pad_scr[:, pad_l:pad_l + L, :] = x.astype(pad_scr.dtype)
        xp = pad_scr[...]
        # im2col: K shifted windows concatenated on the lane axis -> ONE MXU matmul
        cols = jnp.concatenate([xp[:, k:k + L, :] for k in range(K)], axis=-1)
        y = jnp.dot(cols.reshape(bn * L, K * C), w_flat,
                    preferred_element_type=jnp.float32)
        return y.reshape(bn, L, Cout) + b     # bias in f32

    h1 = conv_same(x_ref[...], pad1_scr, w1_ref[...], b1_ref[...])   # (bn, L, F1) f32
    h2 = conv_same(h1, pad2_scr, w2_ref[...], b2_ref[...])           # (bn, L, F2) f32

    wcat = wcat_ref[...]
    bl = bl_ref[...]

    # LSTM: fully unrolled time loop, h/c carried in vregs.
    # MaxPool1d(pool) is fused into the per-step input read; input+recurrent projections are
    # fused into ONE matmul per step via lane-concat [x_t | h_{t-1}] against [W_ih; W_hh].
    h = jnp.zeros((bn, H), jnp.float32)
    c = jnp.zeros((bn, H), jnp.float32)
    hs = []
    for t in range(T):
        x_t = jnp.max(h2[:, t * pool:(t + 1) * pool, :], axis=1)     # (bn, F2)
        xi = jnp.concatenate([x_t.astype(mm_dtype), h.astype(mm_dtype)], axis=-1)
        gates = jnp.dot(xi, wcat, preferred_element_type=jnp.float32) + bl   # (bn, 4H) f32
        i_g = jax.nn.sigmoid(gates[:, 0:H])
        f_g = jax.nn.sigmoid(gates[:, H:2 * H])
        g_g = jnp.tanh(gates[:, 2 * H:3 * H])
        o_g = jax.nn.sigmoid(gates[:, 3 * H:4 * H])
        c = f_g * c + i_g * g_g
        h = o_g * jnp.tanh(c)
        hs.append(h)

    # single lane-dense store of all hidden states: (bn, T*H) with T*H >= 128 lanes
    out_ref[...] = jnp.concatenate(hs, axis=-1).astype(out_ref.dtype)

    # Linear head on the last hidden state, fused into the same kernel.
    head = jnp.dot(h.astype(mm_dtype), wo_ref[...],
                   preferred_element_type=jnp.float32) + bo_ref[...]
    head_ref[...] = head.astype(head_ref.dtype)


# --------------------------------- JAX wrapper -----------------------------------


def _pick_block_n(n, max_bn=128):
    bn = min(n, max_bn)
    while n % bn:
        bn -= 1
    return bn


@functools.partial(jax.jit, static_argnames=("kernel_size", "pool_size", "mm_dtype"))
def cnn_lstm_forward(x_ncl, params, *, kernel_size, pool_size,
                     mm_dtype=jnp.float32):
    """Mirrors CNN_LSTM.forward: returns (lstm_outputs, output(hidden))."""
    N, Cin, L = x_ncl.shape
    K, pool = kernel_size, pool_size
    T = L // pool                                  # MaxPool1d floor-truncates
    F1 = params["w1"].shape[-1]
    F2 = params["w2"].shape[-1]
    H = params["w_hh"].shape[0]
    O = params["w_out"].shape[-1]

    # one tiny boundary transpose NCL -> NLC; all other layout work lives in the kernel
    x_nlc = jnp.transpose(x_ncl, (0, 2, 1)).astype(mm_dtype)
    # weight prep: im2col-flatten conv weights; fuse LSTM weights on the contraction axis;
    # optional bf16 matmul operands (v6e/v7x MXU)
    w1 = params["w1"].reshape(K * Cin, F1).astype(mm_dtype)
    w2 = params["w2"].reshape(K * F1, F2).astype(mm_dtype)
    w_cat = jnp.concatenate([params["w_ih"], params["w_hh"]], axis=0).astype(mm_dtype)
    w_out = params["w_out"].astype(mm_dtype)
    b1 = params["b1"].reshape(1, 1, F1)
    b2 = params["b2"].reshape(1, 1, F2)
    b_lstm = params["b_lstm"].reshape(1, 4 * H)
    b_out = params["b_out"].reshape(1, O)

    bn = _pick_block_n(N)                          # "parallel" batch axis (scales to v7x 2 TCs)
    grid = (N // bn,)

    kernel = functools.partial(cnn_lstm_kernel, K=K, pool=pool, T=T)

    out_flat, head = pl.pallas_call(
        kernel,
        grid=grid,
        in_specs=[
            pl.BlockSpec((bn, L, Cin), lambda i: (i, 0, 0)),
            pl.BlockSpec((K * Cin, F1), lambda i: (0, 0)),
            pl.BlockSpec((1, 1, F1), lambda i: (0, 0, 0)),
            pl.BlockSpec((K * F1, F2), lambda i: (0, 0)),
            pl.BlockSpec((1, 1, F2), lambda i: (0, 0, 0)),
            pl.BlockSpec((F2 + H, 4 * H), lambda i: (0, 0)),
            pl.BlockSpec((1, 4 * H), lambda i: (0, 0)),
            pl.BlockSpec((H, O), lambda i: (0, 0)),
            pl.BlockSpec((1, O), lambda i: (0, 0)),
        ],
        out_specs=(
            pl.BlockSpec((bn, T * H), lambda i: (i, 0)),
            pl.BlockSpec((bn, O), lambda i: (i, 0)),
        ),
        out_shape=(
            jax.ShapeDtypeStruct((N, T * H), jnp.float32),
            jax.ShapeDtypeStruct((N, O), jnp.float32),
        ),
        scratch_shapes=[
            pltpu.VMEM((bn, L + K - 1, Cin), mm_dtype),   # conv1 zero-halo buffer
            pltpu.VMEM((bn, L + K - 1, F1), mm_dtype),    # conv2 zero-halo buffer
        ],
        compiler_params=pltpu.CompilerParams(
            dimension_semantics=("parallel",),            # batch tiles are independent
            vmem_limit_bytes=32 * 1024 * 1024,            # explicit, safe on v5e/v6e/v7x
        ),
    )(x_nlc, w1, b1, w2, b2, w_cat, b_lstm, w_out, b_out)

    # (N, T*H) and (N, T, H) are row-major identical -> free reshape outside the kernel.
    out = out_flat.reshape(N, T, H)
    # PyTorch hidden is (1, N, H) -> output(hidden) is (1, N, output_size)
    return out, head[None]


# ----------------------------- deterministic params ------------------------------


def init_params(key, kernel_size, n_filters1, n_filters2, hidden_size,
                num_features, output_size):
    ks = jax.random.split(key, 10)

    def u(k, shape, fan_in):
        bound = 1.0 / jnp.sqrt(jnp.float32(fan_in))
        return jax.random.uniform(k, shape, jnp.float32, -bound, bound)

    K, H = kernel_size, hidden_size
    return dict(
        w1=u(ks[0], (K, num_features, n_filters1), num_features * K),
        b1=u(ks[1], (n_filters1,), num_features * K),
        w2=u(ks[2], (K, n_filters1, n_filters2), n_filters1 * K),
        b2=u(ks[3], (n_filters2,), n_filters1 * K),
        w_ih=u(ks[4], (n_filters2, 4 * H), H),         # (4H, F2).T, gate order i,f,g,o
        w_hh=u(ks[5], (H, 4 * H), H),                  # (4H, H).T
        b_lstm=u(ks[6], (4 * H,), H) + u(ks[7], (4 * H,), H),  # b_ih + b_hh
        w_out=u(ks[8], (H, output_size), H),           # (O, H).T
        b_out=u(ks[9], (output_size,), H),
    )


# ------------------------------ pure-JAX reference --------------------------------


def ref_forward(x_ncl, p, kernel_size, pool_size):
    K = kernel_size
    x = jnp.transpose(x_ncl, (0, 2, 1))

    def conv(x, w, b):
        N, L, _ = x.shape
        pad_l = (K - 1) // 2
        pad_r = K - 1 - pad_l
        xp = jnp.pad(x, ((0, 0), (pad_l, pad_r), (0, 0)))
        out = sum(jnp.einsum("nlc,co->nlo", xp[:, k:k + L, :], w[k],
                             precision=jax.lax.Precision.HIGHEST)
                  for k in range(K))
        return out + b

    h = conv(conv(x, p["w1"], p["b1"]), p["w2"], p["b2"])
    N, L, F = h.shape
    T = L // pool_size
    pooled = jnp.max(h[:, :T * pool_size, :].reshape(N, T, pool_size, F), axis=2)
    H = p["w_hh"].shape[0]

    def step(carry, x_t):
        hprev, cprev = carry
        g = x_t @ p["w_ih"] + hprev @ p["w_hh"] + p["b_lstm"]
        i = jax.nn.sigmoid(g[:, :H])
        f = jax.nn.sigmoid(g[:, H:2 * H])
        gg = jnp.tanh(g[:, 2 * H:3 * H])
        o = jax.nn.sigmoid(g[:, 3 * H:])
        c = f * cprev + i * gg
        hn = o * jnp.tanh(c)
        return (hn, c), hn

    init = (jnp.zeros((N, H), jnp.float32), jnp.zeros((N, H), jnp.float32))
    (h_last, _), outs = jax.lax.scan(step, init, pooled.transpose(1, 0, 2))
    return outs.transpose(1, 0, 2), (h_last @ p["w_out"] + p["b_out"])[None]


# ----------------------------------- main ------------------------------------

if __name__ == "__main__":
    kernel_size, n_filters1, n_filters2 = 3, 8, 16
    pool_size, hidden_size, num_features, output_size = 2, 32, 4, 4
    N, L = 2, 16

    key = jax.random.PRNGKey(0)
    kp, kx = jax.random.split(key)
    params = init_params(kp, kernel_size, n_filters1, n_filters2, hidden_size,
                         num_features, output_size)
    x = jax.random.normal(kx, (N, num_features, L), jnp.float32)  # (N, C_in, L)

    ref_out, ref_head = ref_forward(x, params, kernel_size, pool_size)

    # f32 matmul operands (exact check)
    out, head = cnn_lstm_forward(x, params, kernel_size=kernel_size,
                                 pool_size=pool_size)
    out, head = jax.block_until_ready((out, head))
    assert out.shape == (N, L // pool_size, hidden_size)
    assert head.shape == (1, N, output_size)
    assert jnp.allclose(out, ref_out, atol=2e-3, rtol=2e-2)
    assert jnp.allclose(head, ref_head, atol=2e-3, rtol=2e-2)

    # bf16 MXU operands (v6e/v7x path), f32 gate math / accumulation -> looser tolerance
    out_bf, head_bf = cnn_lstm_forward(x, params, kernel_size=kernel_size,
                                       pool_size=pool_size,
                                       mm_dtype=jnp.bfloat16)
    out_bf, head_bf = jax.block_until_ready((out_bf, head_bf))
    assert jnp.allclose(out_bf, ref_out, atol=1e-1, rtol=1e-1)
    assert jnp.allclose(head_bf, ref_head, atol=1e-1, rtol=1e-1)

    print("KERNEL_OK")
</pallas_src>

<mosaic_0001>
module attributes {stable_mosaic.version = 11 : i64} {
  func.func @cnn_lstm_kernel(%arg0: i32, %arg1: memref<2x16x4xf32, #tpu.memory_space<vmem>>, %arg2: memref<12x8xf32, #tpu.memory_space<vmem>>, %arg3: memref<1x1x8xf32, #tpu.memory_space<vmem>>, %arg4: memref<24x16xf32, #tpu.memory_space<vmem>>, %arg5: memref<1x1x16xf32, #tpu.memory_space<vmem>>, %arg6: memref<48x128xf32, #tpu.memory_space<vmem>>, %arg7: memref<1x128xf32, #tpu.memory_space<vmem>>, %arg8: memref<32x4xf32, #tpu.memory_space<vmem>>, %arg9: memref<1x4xf32, #tpu.memory_space<vmem>>, %arg10: memref<2x256xf32, #tpu.memory_space<vmem>>, %arg11: memref<2x4xf32, #tpu.memory_space<vmem>>, %arg12: memref<2x18x4xf32, #tpu.memory_space<vmem>>, %arg13: memref<2x18x8xf32, #tpu.memory_space<vmem>>) attributes {dimension_semantics = [#tpu.dimension_semantics<parallel>], iteration_bounds = array<i64: 1>, scalar_prefetch = 0 : i64, scratch_operands = 2 : i64, tpu.core_type = #tpu.core_type<tc>, window_params = [{transform_indices = @transform_0, window_bounds = array<i64: 2, 16, 4>}, {pipeline_mode = #tpu.pipeline_mode<synchronous>, transform_indices = @transform_1, window_bounds = array<i64: 12, 8>}, {pipeline_mode = #tpu.pipeline_mode<synchronous>, transform_indices = @transform_2, window_bounds = array<i64: 1, 1, 8>}, {pipeline_mode = #tpu.pipeline_mode<synchronous>, transform_indices = @transform_3, window_bounds = array<i64: 24, 16>}, {pipeline_mode = #tpu.pipeline_mode<synchronous>, transform_indices = @transform_4, window_bounds = array<i64: 1, 1, 16>}, {pipeline_mode = #tpu.pipeline_mode<synchronous>, transform_indices = @transform_5, window_bounds = array<i64: 48, 128>}, {pipeline_mode = #tpu.pipeline_mode<synchronous>, transform_indices = @transform_6, window_bounds = array<i64: 1, 128>}, {pipeline_mode = #tpu.pipeline_mode<synchronous>, transform_indices = @transform_7, window_bounds = array<i64: 32, 4>}, {pipeline_mode = #tpu.pipeline_mode<synchronous>, transform_indices = @transform_8, window_bounds = array<i64: 1, 4>}, {transform_indices = @transform_9, window_bounds = array<i64: 2, 256>}, {transform_indices = @transform_10, window_bounds = array<i64: 2, 4>}]} {
    %c0 = arith.constant 0 : index
    %c0_0 = arith.constant 0 : index
    %c0_1 = arith.constant 0 : index
    %0 = vector.load %arg1[%c0, %c0_0, %c0_1] : memref<2x16x4xf32, #tpu.memory_space<vmem>>, vector<2x16x4xf32>
    %c0_2 = arith.constant 0 : index
    %c0_3 = arith.constant 0 : index
    %1 = vector.load %arg2[%c0_2, %c0_3] : memref<12x8xf32, #tpu.memory_space<vmem>>, vector<12x8xf32>
    %c0_4 = arith.constant 0 : index
    %c0_5 = arith.constant 0 : index
    %c0_6 = arith.constant 0 : index
    %2 = vector.load %arg3[%c0_4, %c0_5, %c0_6] : memref<1x1x8xf32, #tpu.memory_space<vmem>>, vector<1x1x8xf32>
    %cst = arith.constant 0.000000e+00 : f32
    %3 = vector.broadcast %cst : f32 to vector<2x18x4xf32>
    %c0_7 = arith.constant 0 : index
    %c0_8 = arith.constant 0 : index
    %c0_9 = arith.constant 0 : index
    %4 = vector.load %arg12[%c0_7, %c0_8, %c0_9] : memref<2x18x4xf32, #tpu.memory_space<vmem>>, vector<2x18x4xf32>
    tpu.vector_store %arg12[%c0_7, %c0_8, %c0_9], %3 {strides = array<i32>} : memref<2x18x4xf32, #tpu.memory_space<vmem>>, vector<2x18x4xf32>,
    %c0_10 = arith.constant 0 : index
    %c1 = arith.constant 1 : index
    %c0_11 = arith.constant 0 : index
    %5 = vector.load %arg12[%c0_10, %c1, %c0_11] : memref<2x18x4xf32, #tpu.memory_space<vmem>>, vector<2x16x4xf32>
    tpu.vector_store %arg12[%c0_10, %c1, %c0_11], %0 {strides = array<i32>} : memref<2x18x4xf32, #tpu.memory_space<vmem>>, vector<2x16x4xf32>,
    %c0_12 = arith.constant 0 : index
    %c0_13 = arith.constant 0 : index
    %c0_14 = arith.constant 0 : index
    %6 = vector.load %arg12[%c0_12, %c0_13, %c0_14] : memref<2x18x4xf32, #tpu.memory_space<vmem>>, vector<2x18x4xf32>
    %7 = vector.extract_strided_slice %6 {offsets = [0, 0, 0], sizes = [2, 16, 4], strides = [1, 1, 1]} : vector<2x18x4xf32> to vector<2x16x4xf32>
    %8 = vector.extract_strided_slice %6 {offsets = [0, 1, 0], sizes = [2, 16, 4], strides = [1, 1, 1]} : vector<2x18x4xf32> to vector<2x16x4xf32>
    %9 = vector.extract_strided_slice %6 {offsets = [0, 2, 0], sizes = [2, 16, 4], strides = [1, 1, 1]} : vector<2x18x4xf32> to vector<2x16x4xf32>
    %10 = tpu.concatenate %7, %8, %9 in 2 : vector<2x16x4xf32>, vector<2x16x4xf32>, vector<2x16x4xf32> -> vector<2x16x12xf32>
    %11 = vector.shape_cast %10 : vector<2x16x12xf32> to vector<32x12xf32>
    %cst_15 = arith.constant dense<0.000000e+00> : vector<32x8xf32>
    %12 = tpu.matmul %11, %1, %cst_15 {dimension_numbers = #tpu.dot_dimension_numbers<[1], [0], [0], [1], [0, 0, 1, 1], [], []>} : vector<32x12xf32>, vector<12x8xf32>, vector<32x8xf32> -> vector<32x8xf32>
    %13 = vector.shape_cast %12 : vector<32x8xf32> to vector<2x16x8xf32>
    %14 = vector.broadcast %2 : vector<1x1x8xf32> to vector<2x16x8xf32>
    %15 = arith.addf %13, %14 : vector<2x16x8xf32>
    %c0_16 = arith.constant 0 : index
    %c0_17 = arith.constant 0 : index
    %16 = vector.load %arg4[%c0_16, %c0_17] : memref<24x16xf32, #tpu.memory_space<vmem>>, vector<24x16xf32>
    %c0_18 = arith.constant 0 : index
    %c0_19 = arith.constant 0 : index
    %c0_20 = arith.constant 0 : index
    %17 = vector.load %arg5[%c0_18, %c0_19, %c0_20] : memref<1x1x16xf32, #tpu.memory_space<vmem>>, vector<1x1x16xf32>
    %cst_21 = arith.constant 0.000000e+00 : f32
    %18 = vector.broadcast %cst_21 : f32 to vector<2x18x8xf32>
    %c0_22 = arith.constant 0 : index
    %c0_23 = arith.constant 0 : index
    %c0_24 = arith.constant 0 : index
    %19 = vector.load %arg13[%c0_22, %c0_23, %c0_24] : memref<2x18x8xf32, #tpu.memory_space<vmem>>, vector<2x18x8xf32>
    tpu.vector_store %arg13[%c0_22, %c0_23, %c0_24], %18 {strides = array<i32>} : memref<2x18x8xf32, #tpu.memory_space<vmem>>, vector<2x18x8xf32>,
    %c0_25 = arith.constant 0 : index
    %c1_26 = arith.constant 1 : index
    %c0_27 = arith.constant 0 : index
    %20 = vector.load %arg13[%c0_25, %c1_26, %c0_27] : memref<2x18x8xf32, #tpu.memory_space<vmem>>, vector<2x16x8xf32>
    tpu.vector_store %arg13[%c0_25, %c1_26, %c0_27], %15 {strides = array<i32>} : memref<2x18x8xf32, #tpu.memory_space<vmem>>, vector<2x16x8xf32>,
    %c0_28 = arith.constant 0 : index
    %c0_29 = arith.constant 0 : index
    %c0_30 = arith.constant 0 : index
    %21 = vector.load %arg13[%c0_28, %c0_29, %c0_30] : memref<2x18x8xf32, #tpu.memory_space<vmem>>, vector<2x18x8xf32>
    %22 = vector.extract_strided_slice %21 {offsets = [0, 0, 0], sizes = [2, 16, 8], strides = [1, 1, 1]} : vector<2x18x8xf32> to vector<2x16x8xf32>
    %23 = vector.extract_strided_slice %21 {offsets = [0, 1, 0], sizes = [2, 16, 8], strides = [1, 1, 1]} : vector<2x18x8xf32> to vector<2x16x8xf32>
    %24 = vector.extract_strided_slice %21 {offsets = [0, 2, 0], sizes = [2, 16, 8], strides = [1, 1, 1]} : vector<2x18x8xf32> to vector<2x16x8xf32>
    %25 = tpu.concatenate %22, %23, %24 in 2 : vector<2x16x8xf32>, vector<2x16x8xf32>, vector<2x16x8xf32> -> vector<2x16x24xf32>
    %26 = vector.shape_cast %25 : vector<2x16x24xf32> to vector<32x24xf32>
    %cst_31 = arith.constant dense<0.000000e+00> : vector<32x16xf32>
    %27 = tpu.matmul %26, %16, %cst_31 {dimension_numbers = #tpu.dot_dimension_numbers<[1], [0], [0], [1], [0, 0, 1, 1], [], []>} : vector<32x24xf32>, vector<24x16xf32>, vector<32x16xf32> -> vector<32x16xf32>
    %28 = vector.shape_cast %27 : vector<32x16xf32> to vector<2x16x16xf32>
    %29 = vector.broadcast %17 : vector<1x1x16xf32> to vector<2x16x16xf32>
    %30 = arith.addf %28, %29 : vector<2x16x16xf32>
    %c0_32 = arith.constant 0 : index
    %c0_33 = arith.constant 0 : index
    %31 = vector.load %arg6[%c0_32, %c0_33] : memref<48x128xf32, #tpu.memory_space<vmem>>, vector<48x128xf32>
    %c0_34 = arith.constant 0 : index
    %c0_35 = arith.constant 0 : index
    %32 = vector.load %arg7[%c0_34, %c0_35] : memref<1x128xf32, #tpu.memory_space<vmem>>, vector<1x128xf32>
    %cst_36 = arith.constant 0.000000e+00 : f32
    %33 = vector.broadcast %cst_36 : f32 to vector<2x32xf32>
    %cst_37 = arith.constant 0.000000e+00 : f32
    %34 = vector.broadcast %cst_37 : f32 to vector<2x32xf32>
    %35 = vector.extract_strided_slice %30 {offsets = [0, 0, 0], sizes = [2, 2, 16], strides = [1, 1, 1]} : vector<2x16x16xf32> to vector<2x2x16xf32>
    %cst_38 = arith.constant dense<0xFF800000> : vector<2x16xf32>
    %36 = vector.multi_reduction <maximumf>, %35, %cst_38 [1] : vector<2x2x16xf32> to vector<2x16xf32>
    %37 = tpu.concatenate %36, %33 in 1 : vector<2x16xf32>, vector<2x32xf32> -> vector<2x48xf32>
    %cst_39 = arith.constant dense<0.000000e+00> : vector<2x128xf32>
    %38 = tpu.matmul %37, %31, %cst_39 {dimension_numbers = #tpu.dot_dimension_numbers<[1], [0], [0], [1], [0, 0, 1, 1], [], []>} : vector<2x48xf32>, vector<48x128xf32>, vector<2x128xf32> -> vector<2x128xf32>
    %39 = vector.broadcast %32 : vector<1x128xf32> to vector<2x128xf32>
    %40 = arith.addf %38, %39 : vector<2x128xf32>
    %41 = vector.extract_strided_slice %40 {offsets = [0, 0], sizes = [2, 32], strides = [1, 1]} : vector<2x128xf32> to vector<2x32xf32>
    %42 = arith.negf %41 : vector<2x32xf32>
    %43 = math.exp %42 : vector<2x32xf32>
    %cst_40 = arith.constant 1.000000e+00 : f32
    %44 = vector.broadcast %cst_40 : f32 to vector<2x32xf32>
    %45 = arith.addf %44, %43 : vector<2x32xf32>
    %46 = arith.divf %44, %45 : vector<2x32xf32>
    %47 = vector.extract_strided_slice %40 {offsets = [0, 32], sizes = [2, 32], strides = [1, 1]} : vector<2x128xf32> to vector<2x32xf32>
    %48 = arith.negf %47 : vector<2x32xf32>
    %49 = math.exp %48 : vector<2x32xf32>
    %cst_41 = arith.constant 1.000000e+00 : f32
    %50 = vector.broadcast %cst_41 : f32 to vector<2x32xf32>
    %51 = arith.addf %50, %49 : vector<2x32xf32>
    %52 = arith.divf %50, %51 : vector<2x32xf32>
    %53 = vector.extract_strided_slice %40 {offsets = [0, 64], sizes = [2, 32], strides = [1, 1]} : vector<2x128xf32> to vector<2x32xf32>
    %54 = math.tanh %53 : vector<2x32xf32>
    %55 = vector.extract_strided_slice %40 {offsets = [0, 96], sizes = [2, 32], strides = [1, 1]} : vector<2x128xf32> to vector<2x32xf32>
    %56 = arith.negf %55 : vector<2x32xf32>
    %57 = math.exp %56 : vector<2x32xf32>
    %cst_42 = arith.constant 1.000000e+00 : f32
    %58 = vector.broadcast %cst_42 : f32 to vector<2x32xf32>
    %59 = arith.addf %58, %57 : vector<2x32xf32>
    %60 = arith.divf %58, %59 : vector<2x32xf32>
    %61 = arith.mulf %52, %34 : vector<2x32xf32>
    %62 = arith.mulf %46, %54 : vector<2x32xf32>
    %63 = arith.addf %61, %62 : vector<2x32xf32>
    %64 = math.tanh %63 : vector<2x32xf32>
    %65 = arith.mulf %60, %64 : vector<2x32xf32>
    %66 = vector.extract_strided_slice %30 {offsets = [0, 2, 0], sizes = [2, 2, 16], strides = [1, 1, 1]} : vector<2x16x16xf32> to vector<2x2x16xf32>
    %cst_43 = arith.constant dense<0xFF800000> : vector<2x16xf32>
    %67 = vector.multi_reduction <maximumf>, %66, %cst_43 [1] : vector<2x2x16xf32> to vector<2x16xf32>
    %68 = tpu.concatenate %67, %65 in 1 : vector<2x16xf32>, vector<2x32xf32> -> vector<2x48xf32>
    %cst_44 = arith.constant dense<0.000000e+00> : vector<2x128xf32>
    %69 = tpu.matmul %68, %31, %cst_44 {dimension_numbers = #tpu.dot_dimension_numbers<[1], [0], [0], [1], [0, 0, 1, 1], [], []>} : vector<2x48xf32>, vector<48x128xf32>, vector<2x128xf32> -> vector<2x128xf32>
    %70 = vector.broadcast %32 : vector<1x128xf32> to vector<2x128xf32>
    %71 = arith.addf %69, %70 : vector<2x128xf32>
    %72 = vector.extract_strided_slice %71 {offsets = [0, 0], sizes = [2, 32], strides = [1, 1]} : vector<2x128xf32> to vector<2x32xf32>
    %73 = arith.negf %72 : vector<2x32xf32>
    %74 = math.exp %73 : vector<2x32xf32>
    %cst_45 = arith.constant 1.000000e+00 : f32
    %75 = vector.broadcast %cst_45 : f32 to vector<2x32xf32>
    %76 = arith.addf %75, %74 : vector<2x32xf32>
    %77 = arith.divf %75, %76 : vector<2x32xf32>
    %78 = vector.extract_strided_slice %71 {offsets = [0, 32], sizes = [2, 32], strides = [1, 1]} : vector<2x128xf32> to vector<2x32xf32>
    %79 = arith.negf %78 : vector<2x32xf32>
    %80 = math.exp %79 : vector<2x32xf32>
    %cst_46 = arith.constant 1.000000e+00 : f32
    %81 = vector.broadcast %cst_46 : f32 to vector<2x32xf32>
    %82 = arith.addf %81, %80 : vector<2x32xf32>
    %83 = arith.divf %81, %82 : vector<2x32xf32>
    %84 = vector.extract_strided_slice %71 {offsets = [0, 64], sizes = [2, 32], strides = [1, 1]} : vector<2x128xf32> to vector<2x32xf32>
    %85 = math.tanh %84 : vector<2x32xf32>
    %86 = vector.extract_strided_slice %71 {offsets = [0, 96], sizes = [2, 32], strides = [1, 1]} : vector<2x128xf32> to vector<2x32xf32>
    %87 = arith.negf %86 : vector<2x32xf32>
    %88 = math.exp %87 : vector<2x32xf32>
    %cst_47 = arith.constant 1.000000e+00 : f32
    %89 = vector.broadcast %cst_47 : f32 to vector<2x32xf32>
    %90 = arith.addf %89, %88 : vector<2x32xf32>
    %91 = arith.divf %89, %90 : vector<2x32xf32>
    %92 = arith.mulf %83, %63 : vector<2x32xf32>
    %93 = arith.mulf %77, %85 : vector<2x32xf32>
    %94 = arith.addf %92, %93 : vector<2x32xf32>
    %95 = math.tanh %94 : vector<2x32xf32>
    %96 = arith.mulf %91, %95 : vector<2x32xf32>
    %97 = vector.extract_strided_slice %30 {offsets = [0, 4, 0], sizes = [2, 2, 16], strides = [1, 1, 1]} : vector<2x16x16xf32> to vector<2x2x16xf32>
    %cst_48 = arith.constant dense<0xFF800000> : vector<2x16xf32>
    %98 = vector.multi_reduction <maximumf>, %97, %cst_48 [1] : vector<2x2x16xf32> to vector<2x16xf32>
    %99 = tpu.concatenate %98, %96 in 1 : vector<2x16xf32>, vector<2x32xf32> -> vector<2x48xf32>
    %cst_49 = arith.constant dense<0.000000e+00> : vector<2x128xf32>
    %100 = tpu.matmul %99, %31, %cst_49 {dimension_numbers = #tpu.dot_dimension_numbers<[1], [0], [0], [1], [0, 0, 1, 1], [], []>} : vector<2x48xf32>, vector<48x128xf32>, vector<2x128xf32> -> vector<2x128xf32>
    %101 = vector.broadcast %32 : vector<1x128xf32> to vector<2x128xf32>
    %102 = arith.addf %100, %101 : vector<2x128xf32>
    %103 = vector.extract_strided_slice %102 {offsets = [0, 0], sizes = [2, 32], strides = [1, 1]} : vector<2x128xf32> to vector<2x32xf32>
    %104 = arith.negf %103 : vector<2x32xf32>
    %105 = math.exp %104 : vector<2x32xf32>
    %cst_50 = arith.constant 1.000000e+00 : f32
    %106 = vector.broadcast %cst_50 : f32 to vector<2x32xf32>
    %107 = arith.addf %106, %105 : vector<2x32xf32>
    %108 = arith.divf %106, %107 : vector<2x32xf32>
    %109 = vector.extract_strided_slice %102 {offsets = [0, 32], sizes = [2, 32], strides = [1, 1]} : vector<2x128xf32> to vector<2x32xf32>
    %110 = arith.negf %109 : vector<2x32xf32>
    %111 = math.exp %110 : vector<2x32xf32>
    %cst_51 = arith.constant 1.000000e+00 : f32
    %112 = vector.broadcast %cst_51 : f32 to vector<2x32xf32>
    %113 = arith.addf %112, %111 : vector<2x32xf32>
    %114 = arith.divf %112, %113 : vector<2x32xf32>
    %115 = vector.extract_strided_slice %102 {offsets = [0, 64], sizes = [2, 32], strides = [1, 1]} : vector<2x128xf32> to vector<2x32xf32>
    %116 = math.tanh %115 : vector<2x32xf32>
    %117 = vector.extract_strided_slice %102 {offsets = [0, 96], sizes = [2, 32], strides = [1, 1]} : vector<2x128xf32> to vector<2x32xf32>
    %118 = arith.negf %117 : vector<2x32xf32>
    %119 = math.exp %118 : vector<2x32xf32>
    %cst_52 = arith.constant 1.000000e+00 : f32
    %120 = vector.broadcast %cst_52 : f32 to vector<2x32xf32>
    %121 = arith.addf %120, %119 : vector<2x32xf32>
    %122 = arith.divf %120, %121 : vector<2x32xf32>
    %123 = arith.mulf %114, %94 : vector<2x32xf32>
    %124 = arith.mulf %108, %116 : vector<2x32xf32>
    %125 = arith.addf %123, %124 : vector<2x32xf32>
    %126 = math.tanh %125 : vector<2x32xf32>
    %127 = arith.mulf %122, %126 : vector<2x32xf32>
    %128 = vector.extract_strided_slice %30 {offsets = [0, 6, 0], sizes = [2, 2, 16], strides = [1, 1, 1]} : vector<2x16x16xf32> to vector<2x2x16xf32>
    %cst_53 = arith.constant dense<0xFF800000> : vector<2x16xf32>
    %129 = vector.multi_reduction <maximumf>, %128, %cst_53 [1] : vector<2x2x16xf32> to vector<2x16xf32>
    %130 = tpu.concatenate %129, %127 in 1 : vector<2x16xf32>, vector<2x32xf32> -> vector<2x48xf32>
    %cst_54 = arith.constant dense<0.000000e+00> : vector<2x128xf32>
    %131 = tpu.matmul %130, %31, %cst_54 {dimension_numbers = #tpu.dot_dimension_numbers<[1], [0], [0], [1], [0, 0, 1, 1], [], []>} : vector<2x48xf32>, vector<48x128xf32>, vector<2x128xf32> -> vector<2x128xf32>
    %132 = vector.broadcast %32 : vector<1x128xf32> to vector<2x128xf32>
    %133 = arith.addf %131, %132 : vector<2x128xf32>
    %134 = vector.extract_strided_slice %133 {offsets = [0, 0], sizes = [2, 32], strides = [1, 1]} : vector<2x128xf32> to vector<2x32xf32>
    %135 = arith.negf %134 : vector<2x32xf32>
    %136 = math.exp %135 : vector<2x32xf32>
    %cst_55 = arith.constant 1.000000e+00 : f32
    %137 = vector.broadcast %cst_55 : f32 to vector<2x32xf32>
    %138 = arith.addf %137, %136 : vector<2x32xf32>
    %139 = arith.divf %137, %138 : vector<2x32xf32>
    %140 = vector.extract_strided_slice %133 {offsets = [0, 32], sizes = [2, 32], strides = [1, 1]} : vector<2x128xf32> to vector<2x32xf32>
    %141 = arith.negf %140 : vector<2x32xf32>
    %142 = math.exp %141 : vector<2x32xf32>
    %cst_56 = arith.constant 1.000000e+00 : f32
    %143 = vector.broadcast %cst_56 : f32 to vector<2x32xf32>
    %144 = arith.addf %143, %142 : vector<2x32xf32>
    %145 = arith.divf %143, %144 : vector<2x32xf32>
    %146 = vector.extract_strided_slice %133 {offsets = [0, 64], sizes = [2, 32], strides = [1, 1]} : vector<2x128xf32> to vector<2x32xf32>
    %147 = math.tanh %146 : vector<2x32xf32>
    %148 = vector.extract_strided_slice %133 {offsets = [0, 96], sizes = [2, 32], strides = [1, 1]} : vector<2x128xf32> to vector<2x32xf32>
    %149 = arith.negf %148 : vector<2x32xf32>
    %150 = math.exp %149 : vector<2x32xf32>
    %cst_57 = arith.constant 1.000000e+00 : f32
    %151 = vector.broadcast %cst_57 : f32 to vector<2x32xf32>
    %152 = arith.addf %151, %150 : vector<2x32xf32>
    %153 = arith.divf %151, %152 : vector<2x32xf32>
    %154 = arith.mulf %145, %125 : vector<2x32xf32>
    %155 = arith.mulf %139, %147 : vector<2x32xf32>
    %156 = arith.addf %154, %155 : vector<2x32xf32>
    %157 = math.tanh %156 : vector<2x32xf32>
    %158 = arith.mulf %153, %157 : vector<2x32xf32>
    %159 = vector.extract_strided_slice %30 {offsets = [0, 8, 0], sizes = [2, 2, 16], strides = [1, 1, 1]} : vector<2x16x16xf32> to vector<2x2x16xf32>
    %cst_58 = arith.constant dense<0xFF800000> : vector<2x16xf32>
    %160 = vector.multi_reduction <maximumf>, %159, %cst_58 [1] : vector<2x2x16xf32> to vector<2x16xf32>
    %161 = tpu.concatenate %160, %158 in 1 : vector<2x16xf32>, vector<2x32xf32> -> vector<2x48xf32>
    %cst_59 = arith.constant dense<0.000000e+00> : vector<2x128xf32>
    %162 = tpu.matmul %161, %31, %cst_59 {dimension_numbers = #tpu.dot_dimension_numbers<[1], [0], [0], [1], [0, 0, 1, 1], [], []>} : vector<2x48xf32>, vector<48x128xf32>, vector<2x128xf32> -> vector<2x128xf32>
    %163 = vector.broadcast %32 : vector<1x128xf32> to vector<2x128xf32>
    %164 = arith.addf %162, %163 : vector<2x128xf32>
    %165 = vector.extract_strided_slice %164 {offsets = [0, 0], sizes = [2, 32], strides = [1, 1]} : vector<2x128xf32> to vector<2x32xf32>
    %166 = arith.negf %165 : vector<2x32xf32>
    %167 = math.exp %166 : vector<2x32xf32>
    %cst_60 = arith.constant 1.000000e+00 : f32
    %168 = vector.broadcast %cst_60 : f32 to vector<2x32xf32>
    %169 = arith.addf %168, %167 : vector<2x32xf32>
    %170 = arith.divf %168, %169 : vector<2x32xf32>
    %171 = vector.extract_strided_slice %164 {offsets = [0, 32], sizes = [2, 32], strides = [1, 1]} : vector<2x128xf32> to vector<2x32xf32>
    %172 = arith.negf %171 : vector<2x32xf32>
    %173 = math.exp %172 : vector<2x32xf32>
    %cst_61 = arith.constant 1.000000e+00 : f32
    %174 = vector.broadcast %cst_61 : f32 to vector<2x32xf32>
    %175 = arith.addf %174, %173 : vector<2x32xf32>
    %176 = arith.divf %174, %175 : vector<2x32xf32>
    %177 = vector.extract_strided_slice %164 {offsets = [0, 64], sizes = [2, 32], strides = [1, 1]} : vector<2x128xf32> to vector<2x32xf32>
    %178 = math.tanh %177 : vector<2x32xf32>
    %179 = vector.extract_strided_slice %164 {offsets = [0, 96], sizes = [2, 32], strides = [1, 1]} : vector<2x128xf32> to vector<2x32xf32>
    %180 = arith.negf %179 : vector<2x32xf32>
    %181 = math.exp %180 : vector<2x32xf32>
    %cst_62 = arith.constant 1.000000e+00 : f32
    %182 = vector.broadcast %cst_62 : f32 to vector<2x32xf32>
    %183 = arith.addf %182, %181 : vector<2x32xf32>
    %184 = arith.divf %182, %183 : vector<2x32xf32>
    %185 = arith.mulf %176, %156 : vector<2x32xf32>
    %186 = arith.mulf %170, %178 : vector<2x32xf32>
    %187 = arith.addf %185, %186 : vector<2x32xf32>
    %188 = math.tanh %187 : vector<2x32xf32>
    %189 = arith.mulf %184, %188 : vector<2x32xf32>
    %190 = vector.extract_strided_slice %30 {offsets = [0, 10, 0], sizes = [2, 2, 16], strides = [1, 1, 1]} : vector<2x16x16xf32> to vector<2x2x16xf32>
    %cst_63 = arith.constant dense<0xFF800000> : vector<2x16xf32>
    %191 = vector.multi_reduction <maximumf>, %190, %cst_63 [1] : vector<2x2x16xf32> to vector<2x16xf32>
    %192 = tpu.concatenate %191, %189 in 1 : vector<2x16xf32>, vector<2x32xf32> -> vector<2x48xf32>
    %cst_64 = arith.constant dense<0.000000e+00> : vector<2x128xf32>
    %193 = tpu.matmul %192, %31, %cst_64 {dimension_numbers = #tpu.dot_dimension_numbers<[1], [0], [0], [1], [0, 0, 1, 1], [], []>} : vector<2x48xf32>, vector<48x128xf32>, vector<2x128xf32> -> vector<2x128xf32>
    %194 = vector.broadcast %32 : vector<1x128xf32> to vector<2x128xf32>
    %195 = arith.addf %193, %194 : vector<2x128xf32>
    %196 = vector.extract_strided_slice %195 {offsets = [0, 0], sizes = [2, 32], strides = [1, 1]} : vector<2x128xf32> to vector<2x32xf32>
    %197 = arith.negf %196 : vector<2x32xf32>
    %198 = math.exp %197 : vector<2x32xf32>
    %cst_65 = arith.constant 1.000000e+00 : f32
    %199 = vector.broadcast %cst_65 : f32 to vector<2x32xf32>
    %200 = arith.addf %199, %198 : vector<2x32xf32>
    %201 = arith.divf %199, %200 : vector<2x32xf32>
    %202 = vector.extract_strided_slice %195 {offsets = [0, 32], sizes = [2, 32], strides = [1, 1]} : vector<2x128xf32> to vector<2x32xf32>
    %203 = arith.negf %202 : vector<2x32xf32>
    %204 = math.exp %203 : vector<2x32xf32>
    %cst_66 = arith.constant 1.000000e+00 : f32
    %205 = vector.broadcast %cst_66 : f32 to vector<2x32xf32>
    %206 = arith.addf %205, %204 : vector<2x32xf32>
    %207 = arith.divf %205, %206 : vector<2x32xf32>
    %208 = vector.extract_strided_slice %195 {offsets = [0, 64], sizes = [2, 32], strides = [1, 1]} : vector<2x128xf32> to vector<2x32xf32>
    %209 = math.tanh %208 : vector<2x32xf32>
    %210 = vector.extract_strided_slice %195 {offsets = [0, 96], sizes = [2, 32], strides = [1, 1]} : vector<2x128xf32> to vector<2x32xf32>
    %211 = arith.negf %210 : vector<2x32xf32>
    %212 = math.exp %211 : vector<2x32xf32>
    %cst_67 = arith.constant 1.000000e+00 : f32
    %213 = vector.broadcast %cst_67 : f32 to vector<2x32xf32>
    %214 = arith.addf %213, %212 : vector<2x32xf32>
    %215 = arith.divf %213, %214 : vector<2x32xf32>
    %216 = arith.mulf %207, %187 : vector<2x32xf32>
    %217 = arith.mulf %201, %209 : vector<2x32xf32>
    %218 = arith.addf %216, %217 : vector<2x32xf32>
    %219 = math.tanh %218 : vector<2x32xf32>
    %220 = arith.mulf %215, %219 : vector<2x32xf32>
    %221 = vector.extract_strided_slice %30 {offsets = [0, 12, 0], sizes = [2, 2, 16], strides = [1, 1, 1]} : vector<2x16x16xf32> to vector<2x2x16xf32>
    %cst_68 = arith.constant dense<0xFF800000> : vector<2x16xf32>
    %222 = vector.multi_reduction <maximumf>, %221, %cst_68 [1] : vector<2x2x16xf32> to vector<2x16xf32>
    %223 = tpu.concatenate %222, %220 in 1 : vector<2x16xf32>, vector<2x32xf32> -> vector<2x48xf32>
    %cst_69 = arith.constant dense<0.000000e+00> : vector<2x128xf32>
    %224 = tpu.matmul %223, %31, %cst_69 {dimension_numbers = #tpu.dot_dimension_numbers<[1], [0], [0], [1], [0, 0, 1, 1], [], []>} : vector<2x48xf32>, vector<48x128xf32>, vector<2x128xf32> -> vector<2x128xf32>
    %225 = vector.broadcast %32 : vector<1x128xf32> to vector<2x128xf32>
    %226 = arith.addf %224, %225 : vector<2x128xf32>
    %227 = vector.extract_strided_slice %226 {offsets = [0, 0], sizes = [2, 32], strides = [1, 1]} : vector<2x128xf32> to vector<2x32xf32>
    %228 = arith.negf %227 : vector<2x32xf32>
    %229 = math.exp %228 : vector<2x32xf32>
    %cst_70 = arith.constant 1.000000e+00 : f32
    %230 = vector.broadcast %cst_70 : f32 to vector<2x32xf32>
    %231 = arith.addf %230, %229 : vector<2x32xf32>
    %232 = arith.divf %230, %231 : vector<2x32xf32>
    %233 = vector.extract_strided_slice %226 {offsets = [0, 32], sizes = [2, 32], strides = [1, 1]} : vector<2x128xf32> to vector<2x32xf32>
    %234 = arith.negf %233 : vector<2x32xf32>
    %235 = math.exp %234 : vector<2x32xf32>
    %cst_71 = arith.constant 1.000000e+00 : f32
    %236 = vector.broadcast %cst_71 : f32 to vector<2x32xf32>
    %237 = arith.addf %236, %235 : vector<2x32xf32>
    %238 = arith.divf %236, %237 : vector<2x32xf32>
    %239 = vector.extract_strided_slice %226 {offsets = [0, 64], sizes = [2, 32], strides = [1, 1]} : vector<2x128xf32> to vector<2x32xf32>
    %240 = math.tanh %239 : vector<2x32xf32>
    %241 = vector.extract_strided_slice %226 {offsets = [0, 96], sizes = [2, 32], strides = [1, 1]} : vector<2x128xf32> to vector<2x32xf32>
    %242 = arith.negf %241 : vector<2x32xf32>
    %243 = math.exp %242 : vector<2x32xf32>
    %cst_72 = arith.constant 1.000000e+00 : f32
    %244 = vector.broadcast %cst_72 : f32 to vector<2x32xf32>
    %245 = arith.addf %244, %243 : vector<2x32xf32>
    %246 = arith.divf %244, %245 : vector<2x32xf32>
    %247 = arith.mulf %238, %218 : vector<2x32xf32>
    %248 = arith.mulf %232, %240 : vector<2x32xf32>
    %249 = arith.addf %247, %248 : vector<2x32xf32>
    %250 = math.tanh %249 : vector<2x32xf32>
    %251 = arith.mulf %246, %250 : vector<2x32xf32>
    %252 = vector.extract_strided_slice %30 {offsets = [0, 14, 0], sizes = [2, 2, 16], strides = [1, 1, 1]} : vector<2x16x16xf32> to vector<2x2x16xf32>
    %cst_73 = arith.constant dense<0xFF800000> : vector<2x16xf32>
    %253 = vector.multi_reduction <maximumf>, %252, %cst_73 [1] : vector<2x2x16xf32> to vector<2x16xf32>
    %254 = tpu.concatenate %253, %251 in 1 : vector<2x16xf32>, vector<2x32xf32> -> vector<2x48xf32>
    %cst_74 = arith.constant dense<0.000000e+00> : vector<2x128xf32>
    %255 = tpu.matmul %254, %31, %cst_74 {dimension_numbers = #tpu.dot_dimension_numbers<[1], [0], [0], [1], [0, 0, 1, 1], [], []>} : vector<2x48xf32>, vector<48x128xf32>, vector<2x128xf32> -> vector<2x128xf32>
    %256 = vector.broadcast %32 : vector<1x128xf32> to vector<2x128xf32>
    %257 = arith.addf %255, %256 : vector<2x128xf32>
    %258 = vector.extract_strided_slice %257 {offsets = [0, 0], sizes = [2, 32], strides = [1, 1]} : vector<2x128xf32> to vector<2x32xf32>
    %259 = arith.negf %258 : vector<2x32xf32>
    %260 = math.exp %259 : vector<2x32xf32>
    %cst_75 = arith.constant 1.000000e+00 : f32
    %261 = vector.broadcast %cst_75 : f32 to vector<2x32xf32>
    %262 = arith.addf %261, %260 : vector<2x32xf32>
    %263 = arith.divf %261, %262 : vector<2x32xf32>
    %264 = vector.extract_strided_slice %257 {offsets = [0, 32], sizes = [2, 32], strides = [1, 1]} : vector<2x128xf32> to vector<2x32xf32>
    %265 = arith.negf %264 : vector<2x32xf32>
    %266 = math.exp %265 : vector<2x32xf32>
    %cst_76 = arith.constant 1.000000e+00 : f32
    %267 = vector.broadcast %cst_76 : f32 to vector<2x32xf32>
    %268 = arith.addf %267, %266 : vector<2x32xf32>
    %269 = arith.divf %267, %268 : vector<2x32xf32>
    %270 = vector.extract_strided_slice %257 {offsets = [0, 64], sizes = [2, 32], strides = [1, 1]} : vector<2x128xf32> to vector<2x32xf32>
    %271 = math.tanh %270 : vector<2x32xf32>
    %272 = vector.extract_strided_slice %257 {offsets = [0, 96], sizes = [2, 32], strides = [1, 1]} : vector<2x128xf32> to vector<2x32xf32>
    %273 = arith.negf %272 : vector<2x32xf32>
    %274 = math.exp %273 : vector<2x32xf32>
    %cst_77 = arith.constant 1.000000e+00 : f32
    %275 = vector.broadcast %cst_77 : f32 to vector<2x32xf32>
    %276 = arith.addf %275, %274 : vector<2x32xf32>
    %277 = arith.divf %275, %276 : vector<2x32xf32>
    %278 = arith.mulf %269, %249 : vector<2x32xf32>
    %279 = arith.mulf %263, %271 : vector<2x32xf32>
    %280 = arith.addf %278, %279 : vector<2x32xf32>
    %281 = math.tanh %280 : vector<2x32xf32>
    %282 = arith.mulf %277, %281 : vector<2x32xf32>
    %283 = tpu.concatenate %65, %96, %127, %158, %189, %220, %251, %282 in 1 : vector<2x32xf32>, vector<2x32xf32>, vector<2x32xf32>, vector<2x32xf32>, vector<2x32xf32>, vector<2x32xf32>, vector<2x32xf32>, vector<2x32xf32> -> vector<2x256xf32>
    %c0_78 = arith.constant 0 : index
    %c0_79 = arith.constant 0 : index
    %284 = vector.load %arg10[%c0_78, %c0_79] : memref<2x256xf32, #tpu.memory_space<vmem>>, vector<2x256xf32>
    tpu.vector_store %arg10[%c0_78, %c0_79], %283 {strides = array<i32>} : memref<2x256xf32, #tpu.memory_space<vmem>>, vector<2x256xf32>,
    %c0_80 = arith.constant 0 : index
    %c0_81 = arith.constant 0 : index
    %285 = vector.load %arg8[%c0_80, %c0_81] : memref<32x4xf32, #tpu.memory_space<vmem>>, vector<32x4xf32>
    %cst_82 = arith.constant dense<0.000000e+00> : vector<2x4xf32>
    %286 = tpu.matmul %282, %285, %cst_82 {dimension_numbers = #tpu.dot_dimension_numbers<[1], [0], [0], [1], [0, 0, 1, 1], [], []>} : vector<2x32xf32>, vector<32x4xf32>, vector<2x4xf32> -> vector<2x4xf32>
    %c0_83 = arith.constant 0 : index
    %c0_84 = arith.constant 0 : index
    %287 = vector.load %arg9[%c0_83, %c0_84] : memref<1x4xf32, #tpu.memory_space<vmem>>, vector<1x4xf32>
    %288 = vector.broadcast %287 : vector<1x4xf32> to vector<2x4xf32>
    %289 = arith.addf %286, %288 : vector<2x4xf32>
    %c0_85 = arith.constant 0 : index
    %c0_86 = arith.constant 0 : index
    %290 = vector.load %arg11[%c0_85, %c0_86] : memref<2x4xf32, #tpu.memory_space<vmem>>, vector<2x4xf32>
    tpu.vector_store %arg11[%c0_85, %c0_86], %289 {strides = array<i32>} : memref<2x4xf32, #tpu.memory_space<vmem>>, vector<2x4xf32>,
    return
  }
  func.func @transform_0(%arg0: i32) -> (i32, i32, i32) {
    %c0_i32 = arith.constant 0 : i32
    %c0_i32_0 = arith.constant 0 : i32
    %c0_i32_1 = arith.constant 0 : i32
    return %arg0, %c0_i32, %c0_i32_0 : i32, i32, i32
  }
  func.func @transform_1(%arg0: i32) -> (i32, i32) {
    %c0_i32 = arith.constant 0 : i32
    %c0_i32_0 = arith.constant 0 : i32
    %c0_i32_1 = arith.constant 0 : i32
    return %c0_i32, %c0_i32_0 : i32, i32
  }
  func.func @transform_2(%arg0: i32) -> (i32, i32, i32) {
    %c0_i32 = arith.constant 0 : i32
    %c0_i32_0 = arith.constant 0 : i32
    %c0_i32_1 = arith.constant 0 : i32
    %c0_i32_2 = arith.constant 0 : i32
    return %c0_i32, %c0_i32_0, %c0_i32_1 : i32, i32, i32
  }
  func.func @transform_3(%arg0: i32) -> (i32, i32) {
    %c0_i32 = arith.constant 0 : i32
    %c0_i32_0 = arith.constant 0 : i32
    %c0_i32_1 = arith.constant 0 : i32
    return %c0_i32, %c0_i32_0 : i32, i32
  }
  func.func @transform_4(%arg0: i32) -> (i32, i32, i32) {
    %c0_i32 = arith.constant 0 : i32
    %c0_i32_0 = arith.constant 0 : i32
    %c0_i32_1 = arith.constant 0 : i32
    %c0_i32_2 = arith.constant 0 : i32
    return %c0_i32, %c0_i32_0, %c0_i32_1 : i32, i32, i32
  }
  func.func @transform_5(%arg0: i32) -> (i32, i32) {
    %c0_i32 = arith.constant 0 : i32
    %c0_i32_0 = arith.constant 0 : i32
    %c0_i32_1 = arith.constant 0 : i32
    return %c0_i32, %c0_i32_0 : i32, i32
  }
  func.func @transform_6(%arg0: i32) -> (i32, i32) {
    %c0_i32 = arith.constant 0 : i32
    %c0_i32_0 = arith.constant 0 : i32
    %c0_i32_1 = arith.constant 0 : i32
    return %c0_i32, %c0_i32_0 : i32, i32
  }
  func.func @transform_7(%arg0: i32) -> (i32, i32) {
    %c0_i32 = arith.constant 0 : i32
    %c0_i32_0 = arith.constant 0 : i32
    %c0_i32_1 = arith.constant 0 : i32
    return %c0_i32, %c0_i32_0 : i32, i32
  }
  func.func @transform_8(%arg0: i32) -> (i32, i32) {
    %c0_i32 = arith.constant 0 : i32
    %c0_i32_0 = arith.constant 0 : i32
    %c0_i32_1 = arith.constant 0 : i32
    return %c0_i32, %c0_i32_0 : i32, i32
  }
  func.func @transform_9(%arg0: i32) -> (i32, i32) {
    %c0_i32 = arith.constant 0 : i32
    %c0_i32_0 = arith.constant 0 : i32
    return %arg0, %c0_i32 : i32, i32
  }
  func.func @transform_10(%arg0: i32) -> (i32, i32) {
    %c0_i32 = arith.constant 0 : i32
    %c0_i32_0 = arith.constant 0 : i32
    return %arg0, %c0_i32 : i32, i32
  }
}

</mosaic_0001>

<llo_original>
// kernel: cnn_lstm_forward.1
$region0: #{cnn_lstm_forward.1}
  #allocation0 [shape = 'u32[]', space=smem, size = 0x4, offset = 0x4, fixed_abs, tag = 'smem constant byte address 0x4 - core index']
  #allocation1 [shape = 'u32[144,128]{1,0:T(1,128)}', space=vmem, size = 0x12000, scoped, tag = 'internal scratch']
  #allocation2 [shape = 'f32[2,18,4]{2,1,0:T(8,128)}', space=vmem, size = 0x6000, scoped, tag = 'scratch operand']
  #allocation3 [shape = 'f32[2,18,8]{2,1,0:T(8,128)}', space=vmem, size = 0x6000, scoped, tag = 'scratch operand']
  %s0 = inlined_call_operand.vmem [shape: f32[2,16,4], index: 0, kind: input, shape index: {}]
  %s1 = inlined_call_operand.vmem [shape: f32[12,8], index: 1, kind: input, shape index: {}]
  %s2 = inlined_call_operand.vmem [shape: f32[1,1,8], index: 2, kind: input, shape index: {}]
  %s3 = inlined_call_operand.vmem [shape: f32[24,16], index: 3, kind: input, shape index: {}]
  %s4 = inlined_call_operand.vmem [shape: f32[1,1,16], index: 4, kind: input, shape index: {}]
  %s5 = inlined_call_operand.vmem [shape: f32[48,128], index: 5, kind: input, shape index: {}]
  %s6 = inlined_call_operand.vmem [shape: f32[1,128], index: 6, kind: input, shape index: {}]
  %s7 = inlined_call_operand.vmem [shape: f32[32,4], index: 7, kind: input, shape index: {}]
  %s8 = inlined_call_operand.vmem [shape: f32[1,4], index: 8, kind: input, shape index: {}]
  %s9 = inlined_call_operand.vmem [shape: f32[2,256], index: 9, kind: output, shape index: {0}]
  %s10 = inlined_call_operand.hbm [shape: f32[2,4], index: 10, kind: output, shape index: {1}]
  %11 = xla_tuple %s9, %s10
  %s12 = sld [smem:[#allocation0]]
  $region54: #{cnn_lstm_forward.1} parent=0
    _
  %s14 = ssub.s32 1, %s12
  %s15 = scalar_select 0, %s14, %s12
  $region1: #{cnn_lstm_forward.1} parent=0
    #allocation4 [shape = 'u8[1024]{0}', space=vmem, size = 0x400, scoped, tag = 'output window, operand 1, single buffered']
    #allocation5 [shape = 's32[1]{0}', space=sflag, size = 0x4, scoped, tag = 'scoped memory for cnn_lstm_forward.1']
    %16 = vsyncpa [#allocation5], 0
    // Predicated region
    $region2: #{cnn_lstm_forward.1} parent=1 // pred_check
      _
    $region3: #{cnn_lstm_forward.1} parent=1 // pred_check_branch
      %18 = sbr.rel (0) target = $region5
    $region4: #{cnn_lstm_forward.1} parent=1 // pred_region
      _
    $region5: #{cnn_lstm_forward.1} parent=1 // pred_fallthru
      _
    // Predicated region
    $region6: #{cnn_lstm_forward.1} parent=1 // pred_check
      _
    $region7: #{cnn_lstm_forward.1} parent=1 // pred_check_branch
      %20 = sbr.rel (0) target = $region9
    $region8: #{cnn_lstm_forward.1} parent=1 // pred_region
      _
    $region9: #{cnn_lstm_forward.1} parent=1 // pred_fallthru
      _
    // Predicated region
    $region10: #{cnn_lstm_forward.1} parent=1 // pred_check
      _
    $region11: #{cnn_lstm_forward.1} parent=1 // pred_check_branch
      %22 = sbr.rel (0) target = $region13
    $region12: #{cnn_lstm_forward.1} parent=1 // pred_region
      _
    $region13: #{cnn_lstm_forward.1} parent=1 // pred_fallthru
      _
    // Predicated region
    $region14: #{cnn_lstm_forward.1} parent=1 // pred_check
      _
    $region15: #{cnn_lstm_forward.1} parent=1 // pred_check_branch
      %24 = sbr.rel (0) target = $region17
    $region16: #{cnn_lstm_forward.1} parent=1 // pred_region
      _
    $region17: #{cnn_lstm_forward.1} parent=1 // pred_fallthru
      _
    // Predicated region
    $region18: #{cnn_lstm_forward.1} parent=1 // pred_check
      _
    $region19: #{cnn_lstm_forward.1} parent=1 // pred_check_branch
      %26 = sbr.rel (0) target = $region21
    $region20: #{cnn_lstm_forward.1} parent=1 // pred_region
      _
    $region21: #{cnn_lstm_forward.1} parent=1 // pred_fallthru
      _
    // Predicated region
    $region22: #{cnn_lstm_forward.1} parent=1 // pred_check
      _
    $region23: #{cnn_lstm_forward.1} parent=1 // pred_check_branch
      %28 = sbr.rel (0) target = $region25
    $region24: #{cnn_lstm_forward.1} parent=1 // pred_region
      _
    $region25: #{cnn_lstm_forward.1} parent=1 // pred_fallthru
      _
    // Predicated region
    $region26: #{cnn_lstm_forward.1} parent=1 // pred_check
      _
    $region27: #{cnn_lstm_forward.1} parent=1 // pred_check_branch
      %30 = sbr.rel (0) target = $region29
    $region28: #{cnn_lstm_forward.1} parent=1 // pred_region
      _
    $region29: #{cnn_lstm_forward.1} parent=1 // pred_fallthru
      _
    // Predicated region
    $region30: #{cnn_lstm_forward.1} parent=1 // pred_check
      _
    $region31: #{cnn_lstm_forward.1} parent=1 // pred_check_branch
      %32 = sbr.rel (0) target = $region33
    $region32: #{cnn_lstm_forward.1} parent=1 // pred_region
      _
    $region33: #{cnn_lstm_forward.1} parent=1 // pred_fallthru
      _
    // Predicated region
    $region34: #{cnn_lstm_forward.1} parent=1 // pred_check
      _
    $region35: #{cnn_lstm_forward.1} parent=1 // pred_check_branch
      %34 = sbr.rel (0) target = $region37
    $region36: #{cnn_lstm_forward.1} parent=1 // pred_region
      _
    $region37: #{cnn_lstm_forward.1} parent=1 // pred_fallthru
      _
    %v35 = vld [vmem:[%s0] sm:$0xff]
    %v36 = vld [vmem:[%s0 + $0x8] sm:$0xff]
    %v37 = vld [vmem:[%s0 + $0x10] sm:$0xff]
    %v38 = vld [vmem:[%s0 + $0x18] sm:$0xff]
    %v39 = vld [vmem:[%s1] sm:$0xff]
    %v40 = vld [vmem:[%s1 + $0x8] sm:$0xf]
    %v41 = vld [vmem:[%s2] sm:$0x1]
    %vm42 = vcmask 31744
    %43 = vst.msk [vmem:[#allocation2] sm:$0xff] %vm42, 0.0
    %44 = vst.msk [vmem:[#allocation2 + $0x8] sm:$0xff] %vm42, 0.0
    %vm45 = vcmask 25600
    %46 = vst.msk [vmem:[#allocation2 + $0x10] sm:$0x3] %vm45, 0.0
    %47 = vst.msk [vmem:[#allocation2 + $0x18] sm:$0xff] %vm42, 0.0
    %48 = vst.msk [vmem:[#allocation2 + $0x20] sm:$0xff] %vm42, 0.0
    %49 = vst.msk [vmem:[#allocation2 + $0x28] sm:$0x3] %vm45, 0.0
    %50 = vst.msk [vmem:[#allocation2 + $0x1] sm:$0xff] %vm42, %v35
    %51 = vst.msk [vmem:[#allocation2 + $0x9] sm:$0xff] %vm42, %v36
    %52 = vst.msk [vmem:[#allocation2 + $0x19] sm:$0xff] %vm42, %v37
    %53 = vst.msk [vmem:[#allocation2 + $0x21] sm:$0xff] %vm42, %v38
    %v54 = vld [vmem:[#allocation2] sm:$0xff]
    %v55 = vld [vmem:[#allocation2 + $0x8] sm:$0xff]
    %v56 = vld [vmem:[#allocation2 + $0x10] sm:$0x3]
    %v57 = vld [vmem:[#allocation2 + $0x18] sm:$0xff]
    %v58 = vld [vmem:[#allocation2 + $0x20] sm:$0xff]
    %v59 = vld [vmem:[#allocation2 + $0x28] sm:$0x3]
    %vm66 = vcmask 1046528
    %v67 = vrot.slane %v54, 1
    %v68 = vrot.slane %v55, 1
    %v69 = vsel %vm66, %v67, %v68
    %v70 = vrot.slane %v56, 1
    %v71 = vsel %vm66, %v68, %v70
    %v72 = vrot.slane %v57, 1
    %v73 = vrot.slane %v58, 1
    %v74 = vsel %vm66, %v72, %v73
    %v75 = vrot.slane %v59, 1
    %v76 = vsel %vm66, %v73, %v75
    %77 = vrot.lane.b32.xlu0 %v69, 4
    %v78 = vpop.permute.xlu0 %77
    %79 = vrot.lane.b32.xlu0 %v71, 4
    %v80 = vpop.permute.xlu0 %79
    %81 = vrot.lane.b32.xlu0 %v74, 4
    %v82 = vpop.permute.xlu0 %81
    %83 = vrot.lane.b32.xlu0 %v76, 4
    %v84 = vpop.permute.xlu0 %83
    %vm89 = vcmask 1045504
    %v90 = vrot.slane %v54, 2
    %v91 = vrot.slane %v55, 2
    %v92 = vsel %vm89, %v90, %v91
    %v93 = vrot.slane %v56, 2
    %v94 = vsel %vm89, %v91, %v93
    %v95 = vrot.slane %v57, 2
    %v96 = vrot.slane %v58, 2
    %v97 = vsel %vm89, %v95, %v96
    %v98 = vrot.slane %v59, 2
    %v99 = vsel %vm89, %v96, %v98
    %100 = vrot.lane.b32.xlu0 %v92, 8
    %v101 = vpop.permute.xlu0 %100
    %102 = vrot.lane.b32.xlu0 %v94, 8
    %v103 = vpop.permute.xlu0 %102
    %104 = vrot.lane.b32.xlu0 %v97, 8
    %v105 = vpop.permute.xlu0 %104
    %106 = vrot.lane.b32.xlu0 %v99, 8
    %v107 = vpop.permute.xlu0 %106
    %v112 = vsel %vm42, %v54, %v78
    %v113 = vsel %vm42, %v55, %v80
    %v114 = vsel %vm42, %v57, %v82
    %v115 = vsel %vm42, %v58, %v84
    %vm116 = vcmask 64512
    %v117 = vsel %vm116, %v112, %v101
    %v118 = vsel %vm116, %v113, %v103
    %v119 = vsel %vm116, %v114, %v105
    %v120 = vsel %vm116, %v115, %v107
    %vm121 = vcmask 97280
    %v123 = vsel %vm121, %v117, 0
    %v126 = vsel %vm121, %v118, 0
    %v129 = vsel %vm121, %v119, 0
    %v132 = vsel %vm121, %v120, 0
    %vm134 = vcmask 1043456
    %v136 = vsel %vm134, %v40, 0
    %138 = vmatprep.subr.mxu0 0.0
    %139 = vmatpush1.msra.mxu0 %v39
    %140 = vmatprep.subr.mxu0 0.0
    %141 = vmatpush1.msra.mxu0 %v136
    %142 = vmatprep.subr.mxu0 0.0
    %143 = vmatpush1.msra.mxu0 0.0
    %144 = vmatprep.subr.mxu0 0.0
    %145 = vmatpush1.msra.mxu0 0.0
    %146 = vmatprep.subr.mxu0 0.0
    %147 = vmatpush1.msra.mxu0 0.0
    %148 = vmatprep.subr.mxu0 0.0
    %149 = vmatpush1.msra.mxu0 0.0
    %150 = vmatprep.subr.mxu0 0.0
    %151 = vmatpush1.msra.mxu0 0.0
    %152 = vmatprep.subr.mxu0 0.0
    %153 = vmatpush1.msra.mxu0 0.0
    %154 = vmatprep.subr.mxu0 0.0
    %155 = vmatpush1.msra.mxu0 0.0
    %156 = vmatprep.subr.mxu0 0.0
    %157 = vmatpush1.msra.mxu0 0.0
    %158 = vmatprep.subr.mxu0 0.0
    %159 = vmatpush1.msra.mxu0 0.0
    %160 = vmatprep.subr.mxu0 0.0
    %161 = vmatpush1.msra.mxu0 0.0
    %162 = vmatprep.subr.mxu0 0.0
    %163 = vmatpush1.msra.mxu0 0.0
    %164 = vmatprep.subr.mxu0 0.0
    %165 = vmatpush1.msra.mxu0 0.0
    %166 = vmatprep.subr.mxu0 0.0
    %167 = vmatpush1.msra.mxu0 0.0
    %168 = vmatprep.subr.mxu0 0.0
    %169 = vmatpush1.msra.mxu0 0.0
    %170 = vmatprep.subr.mxu0 0.0
    %171 = vmatpush1.msra.mxu0 0.0
    %172 = vmatprep.subr.mxu0 0.0
    %173 = vmatpush1.msra.mxu0 0.0
    %174 = vmatprep.subr.mxu0 0.0
    %175 = vmatpush1.msra.mxu0 0.0
    %176 = vmatprep.subr.mxu0 0.0
    %177 = vmatpush1.msra.mxu0 0.0
    %178 = vmatprep.subr.mxu0 0.0
    %179 = vmatpush1.msra.mxu0 0.0
    %180 = vmatprep.subr.mxu0 0.0
    %181 = vmatpush1.msra.mxu0 0.0
    %182 = vmatprep.subr.mxu0 0.0
    %183 = vmatpush1.msra.mxu0 0.0
    %184 = vmatprep.subr.mxu0 0.0
    %185 = vmatpush1.msra.mxu0 0.0
    %186 = vmatprep.subr.mxu0 0.0
    %187 = vmatpush1.msra.mxu0 0.0
    %188 = vmatprep.subr.mxu0 0.0
    %189 = vmatpush1.msra.mxu0 0.0
    %190 = vmatprep.subr.mxu0 0.0
    %191 = vmatpush1.msra.mxu0 0.0
    %192 = vmatprep.subr.mxu0 0.0
    %193 = vmatpush1.msra.mxu0 0.0
    %194 = vmatprep.subr.mxu0 0.0
    %195 = vmatpush1.msra.mxu0 0.0
    %196 = vmatprep.subr.mxu0 0.0
    %197 = vmatpush1.msra.mxu0 0.0
    %198 = vmatprep.subr.mxu0 0.0
    %199 = vmatpush1.msra.mxu0 0.0
    %200 = vmatprep.subr.mxu0 0.0
    %201 = vmatpush1.msra.mxu0 0.0
    %202 = vmatprep.mubr.f32.mxu0 0.0
    %203 = vmatmul.mubr.f32.gmra.mrb[0].mxu0 %v123
    %v204 = vpop.f32.mrb[0].mxu0
    %v205 = vadd.f32 0.0, %v204
    %v206 = vpop.f32.mrb[0].mxu0
    %207 = vmatprep.mubr.f32.mxu0 0.0
    %208 = vmatmul.mubr.f32.gmra.mrb[0].mxu0 %v126
    %v209 = vpop.f32.mrb[0].mxu0
    %v210 = vadd.f32 0.0, %v209
    %v211 = vpop.f32.mrb[0].mxu0
    %212 = vmatprep.mubr.f32.mxu0 0.0
    %213 = vmatmul.mubr.f32.gmra.mrb[0].mxu0 %v129
    %v214 = vpop.f32.mrb[0].mxu0
    %v215 = vadd.f32 0.0, %v214
    %v216 = vpop.f32.mrb[0].mxu0
    %217 = vmatprep.mubr.f32.mxu0 0.0
    %218 = vmatmul.mubr.f32.gmra.mrb[0].mxu0 %v132
    %v219 = vpop.f32.mrb[0].mxu0
    %v220 = vadd.f32 0.0, %v219
    %v221 = vpop.f32.mrb[0].mxu0
    %222 = vdwg.mxu0
    %v224 = vlaneseq
    %v225 = vshrl.u32 %v224, 7
    %v226 = vsub.s32 0, %v225
    %v227 = vrot.slane %v41, %v226
    %v229 = vadd.f32 %v205, %v227
    %v230 = vadd.f32 %v210, %v227
    %v231 = vadd.f32 %v215, %v227
    %v232 = vadd.f32 %v220, %v227
    %v233 = vld [vmem:[%s3] sm:$0xff]
    %v234 = vld [vmem:[%s3 + $0x8] sm:$0xff]
    %v235 = vld [vmem:[%s3 + $0x10] sm:$0xff]
    %v236 = vld [vmem:[%s4] sm:$0x1]
    %237 = vst.msk [vmem:[#allocation3] sm:$0xff] %vm116, 0.0
    %238 = vst.msk [vmem:[#allocation3 + $0x8] sm:$0xff] %vm116, 0.0
    %vm239 = vcmask 58368
    %240 = vst.msk [vmem:[#allocation3 + $0x10] sm:$0x3] %vm239, 0.0
    %241 = vst.msk [vmem:[#allocation3 + $0x18] sm:$0xff] %vm116, 0.0
    %242 = vst.msk [vmem:[#allocation3 + $0x20] sm:$0xff] %vm116, 0.0
    %243 = vst.msk [vmem:[#allocation3 + $0x28] sm:$0x3] %vm239, 0.0
    %244 = vst.msk [vmem:[#allocation3 + $0x1] sm:$0xff] %vm116, %v229
    %245 = vst.msk [vmem:[#allocation3 + $0x9] sm:$0xff] %vm116, %v230
    %246 = vst.msk [vmem:[#allocation3 + $0x19] sm:$0xff] %vm116, %v231
    %247 = vst.msk [vmem:[#allocation3 + $0x21] sm:$0xff] %vm116, %v232
    %v248 = vld [vmem:[#allocation3] sm:$0xff]
    %v249 = vld [vmem:[#allocation3 + $0x8] sm:$0xff]
    %v250 = vld [vmem:[#allocation3 + $0x10] sm:$0x3]
    %v251 = vld [vmem:[#allocation3 + $0x18] sm:$0xff]
    %v252 = vld [vmem:[#allocation3 + $0x20] sm:$0xff]
    %v253 = vld [vmem:[#allocation3 + $0x28] sm:$0x3]
    %v260 = vrot.slane %v248, 1
    %v261 = vrot.slane %v249, 1
    %v262 = vsel %vm66, %v260, %v261
    %v263 = vrot.slane %v250, 1
    %v264 = vsel %vm66, %v261, %v263
    %v265 = vrot.slane %v251, 1
    %v266 = vrot.slane %v252, 1
    %v267 = vsel %vm66, %v265, %v266
    %v268 = vrot.slane %v253, 1
    %v269 = vsel %vm66, %v266, %v268
    %270 = vrot.lane.b32.xlu0 %v262, 8
    %v271 = vpop.permute.xlu0 %270
    %272 = vrot.lane.b32.xlu0 %v264, 8
    %v273 = vpop.permute.xlu0 %272
    %274 = vrot.lane.b32.xlu0 %v267, 8
    %v275 = vpop.permute.xlu0 %274
    %276 = vrot.lane.b32.xlu0 %v269, 8
    %v277 = vpop.permute.xlu0 %276
    %v282 = vrot.slane %v248, 2
    %v283 = vrot.slane %v249, 2
    %v284 = vsel %vm89, %v282, %v283
    %v285 = vrot.slane %v250, 2
    %v286 = vsel %vm89, %v283, %v285
    %v287 = vrot.slane %v251, 2
    %v288 = vrot.slane %v252, 2
    %v289 = vsel %vm89, %v287, %v288
    %v290 = vrot.slane %v253, 2
    %v291 = vsel %vm89, %v288, %v290
    %292 = vrot.lane.b32.xlu0 %v284, 16
    %v293 = vpop.permute.xlu0 %292
    %294 = vrot.lane.b32.xlu0 %v286, 16
    %v295 = vpop.permute.xlu0 %294
    %296 = vrot.lane.b32.xlu0 %v289, 16
    %v297 = vpop.permute.xlu0 %296
    %298 = vrot.lane.b32.xlu0 %v291, 16
    %v299 = vpop.permute.xlu0 %298
    %v304 = vsel %vm116, %v248, %v271
    %v305 = vsel %vm116, %v249, %v273
    %v306 = vsel %vm116, %v251, %v275
    %v307 = vsel %vm116, %v252, %v277
    %vm308 = vcmask 130048
    %v309 = vsel %vm308, %v304, %v293
    %v310 = vsel %vm308, %v305, %v295
    %v311 = vsel %vm308, %v306, %v297
    %v312 = vsel %vm308, %v307, %v299
    %vm313 = vcmask 195584
    %v315 = vsel %vm313, %v309, 0
    %v318 = vsel %vm313, %v310, 0
    %v321 = vsel %vm313, %v311, 0
    %v324 = vsel %vm313, %v312, 0
    %326 = vmatprep.subr.mxu0 0.0
    %327 = vmatpush1.msra.mxu0 %v233
    %328 = vmatprep.subr.mxu0 0.0
    %329 = vmatpush1.msra.mxu0 %v234
    %330 = vmatprep.subr.mxu0 0.0
    %331 = vmatpush1.msra.mxu0 %v235
    %332 = vmatprep.subr.mxu0 0.0
    %333 = vmatpush1.msra.mxu0 0.0
    %334 = vmatprep.subr.mxu0 0.0
    %335 = vmatpush1.msra.mxu0 0.0
    %336 = vmatprep.subr.mxu0 0.0
    %337 = vmatpush1.msra.mxu0 0.0
    %338 = vmatprep.subr.mxu0 0.0
    %339 = vmatpush1.msra.mxu0 0.0
    %340 = vmatprep.subr.mxu0 0.0
    %341 = vmatpush1.msra.mxu0 0.0
    %342 = vmatprep.subr.mxu0 0.0
    %343 = vmatpush1.msra.mxu0 0.0
    %344 = vmatprep.subr.mxu0 0.0
    %345 = vmatpush1.msra.mxu0 0.0
    %346 = vmatprep.subr.mxu0 0.0
    %347 = vmatpush1.msra.mxu0 0.0
    %348 = vmatprep.subr.mxu0 0.0
    %349 = vmatpush1.msra.mxu0 0.0
    %350 = vmatprep.subr.mxu0 0.0
    %351 = vmatpush1.msra.mxu0 0.0
    %352 = vmatprep.subr.mxu0 0.0
    %353 = vmatpush1.msra.mxu0 0.0
    %354 = vmatprep.subr.mxu0 0.0
    %355 = vmatpush1.msra.mxu0 0.0
    %356 = vmatprep.subr.mxu0 0.0
    %357 = vmatpush1.msra.mxu0 0.0
    %358 = vmatprep.subr.mxu0 0.0
    %359 = vmatpush1.msra.mxu0 0.0
    %360 = vmatprep.subr.mxu0 0.0
    %361 = vmatpush1.msra.mxu0 0.0
    %362 = vmatprep.subr.mxu0 0.0
    %363 = vmatpush1.msra.mxu0 0.0
    %364 = vmatprep.subr.mxu0 0.0
    %365 = vmatpush1.msra.mxu0 0.0
    %366 = vmatprep.subr.mxu0 0.0
    %367 = vmatpush1.msra.mxu0 0.0
    %368 = vmatprep.subr.mxu0 0.0
    %369 = vmatpush1.msra.mxu0 0.0
    %370 = vmatprep.subr.mxu0 0.0
    %371 = vmatpush1.msra.mxu0 0.0
    %372 = vmatprep.subr.mxu0 0.0
    %373 = vmatpush1.msra.mxu0 0.0
    %374 = vmatprep.subr.mxu0 0.0
    %375 = vmatpush1.msra.mxu0 0.0
    %376 = vmatprep.subr.mxu0 0.0
    %377 = vmatpush1.msra.mxu0 0.0
    %378 = vmatprep.subr.mxu0 0.0
    %379 = vmatpush1.msra.mxu0 0.0
    %380 = vmatprep.subr.mxu0 0.0
    %381 = vmatpush1.msra.mxu0 0.0
    %382 = vmatprep.subr.mxu0 0.0
    %383 = vmatpush1.msra.mxu0 0.0
    %384 = vmatprep.subr.mxu0 0.0
    %385 = vmatpush1.msra.mxu0 0.0
    %386 = vmatprep.subr.mxu0 0.0
    %387 = vmatpush1.msra.mxu0 0.0
    %388 = vmatprep.subr.mxu0 0.0
    %389 = vmatpush1.msra.mxu0 0.0
    %390 = vmatprep.mubr.f32.mxu0 0.0
    %391 = vmatmul.mubr.f32.gmra.mrb[0].mxu0 %v315
    %v392 = vpop.f32.mrb[0].mxu0
    %v393 = vadd.f32 0.0, %v392
    %v394 = vpop.f32.mrb[0].mxu0
    %395 = vmatprep.mubr.f32.mxu0 0.0
    %396 = vmatmul.mubr.f32.gmra.mrb[0].mxu0 %v318
    %v397 = vpop.f32.mrb[0].mxu0
    %v398 = vadd.f32 0.0, %v397
    %v399 = vpop.f32.mrb[0].mxu0
    %400 = vmatprep.mubr.f32.mxu0 0.0
    %401 = vmatmul.mubr.f32.gmra.mrb[0].mxu0 %v321
    %v402 = vpop.f32.mrb[0].mxu0
    %v403 = vadd.f32 0.0, %v402
    %v404 = vpop.f32.mrb[0].mxu0
    %405 = vmatprep.mubr.f32.mxu0 0.0
    %406 = vmatmul.mubr.f32.gmra.mrb[0].mxu0 %v324
    %v407 = vpop.f32.mrb[0].mxu0
    %v408 = vadd.f32 0.0, %v407
    %v409 = vpop.f32.mrb[0].mxu0
    %410 = vdwg.mxu0
    %v412 = vlaneseq
    %v413 = vshrl.u32 %v412, 7
    %v414 = vsub.s32 0, %v413
    %v415 = vrot.slane %v236, %v414
    %v417 = vadd.f32 %v393, %v415
    %v418 = vadd.f32 %v398, %v415
    %v419 = vadd.f32 %v403, %v415
    %v420 = vadd.f32 %v408, %v415
    %v421 = vld [vmem:[%s5] sm:$0xff]
    %v422 = vld [vmem:[%s5 + $0x8] sm:$0xff]
    %v423 = vld [vmem:[%s5 + $0x10] sm:$0xff]
    %v424 = vld [vmem:[%s5 + $0x18] sm:$0xff]
    %v425 = vld [vmem:[%s5 + $0x20] sm:$0xff]
    %v426 = vld [vmem:[%s5 + $0x28] sm:$0xff]
    %v427 = vld [vmem:[%s6] sm:$0x1]
    %vm428 = vcmask 123904
    %v429 = vsel %vm428, %v417, -inf
    %v430 = vrot.slane %v429, 4
    %v431 = vmax.f32 %v429, %v430
    %v432 = vrot.slane %v431, 2
    %v433 = vmax.f32 %v431, %v432
    %v434 = vrot.slane %v433, 1
    %v435 = vmax.f32 %v433, %v434
    %v436 = vsel %vm428, %v419, -inf
    %v437 = vrot.slane %v436, 4
    %v438 = vmax.f32 %v436, %v437
    %v439 = vrot.slane %v438, 2
    %v440 = vmax.f32 %v438, %v439
    %v441 = vrot.slane %v440, 1
    %v442 = vmax.f32 %v440, %v441
    %vm445 = vcmask 1041409
    %v446 = vsel %vm445, %v442, %v435
    %v448 = vsel %vm308, %v446, 0.0
    %v450 = vlaneseq
    %v451 = vshrl.u32 %v450, 7
    %v452 = vsub.s32 0, %v451
    %v453 = vrot.slane %v427, %v452
    %vm455 = vcmask 392192
    %v457 = vsel %vm455, %v448, 0
    %459 = vmatprep.subr.mxu0 0.0
    %460 = vmatpush1.msra.mxu0 %v421
    %461 = vmatprep.subr.mxu0 0.0
    %462 = vmatpush1.msra.mxu0 %v422
    %463 = vmatprep.subr.mxu0 0.0
    %464 = vmatpush1.msra.mxu0 %v423
    %465 = vmatprep.subr.mxu0 0.0
    %466 = vmatpush1.msra.mxu0 %v424
    %467 = vmatprep.subr.mxu0 0.0
    %468 = vmatpush1.msra.mxu0 %v425
    %469 = vmatprep.subr.mxu0 0.0
    %470 = vmatpush1.msra.mxu0 %v426
    %471 = vmatprep.subr.mxu0 0.0
    %472 = vmatpush1.msra.mxu0 0.0
    %473 = vmatprep.subr.mxu0 0.0
    %474 = vmatpush1.msra.mxu0 0.0
    %475 = vmatprep.subr.mxu0 0.0
    %476 = vmatpush1.msra.mxu0 0.0
    %477 = vmatprep.subr.mxu0 0.0
    %478 = vmatpush1.msra.mxu0 0.0
    %479 = vmatprep.subr.mxu0 0.0
    %480 = vmatpush1.msra.mxu0 0.0
    %481 = vmatprep.subr.mxu0 0.0
    %482 = vmatpush1.msra.mxu0 0.0
    %483 = vmatprep.subr.mxu0 0.0
    %484 = vmatpush1.msra.mxu0 0.0
    %485 = vmatprep.subr.mxu0 0.0
    %486 = vmatpush1.msra.mxu0 0.0
    %487 = vmatprep.subr.mxu0 0.0
    %488 = vmatpush1.msra.mxu0 0.0
    %489 = vmatprep.subr.mxu0 0.0
    %490 = vmatpush1.msra.mxu0 0.0
    %491 = vmatprep.subr.mxu0 0.0
    %492 = vmatpush1.msra.mxu0 0.0
    %493 = vmatprep.subr.mxu0 0.0
    %494 = vmatpush1.msra.mxu0 0.0
    %495 = vmatprep.subr.mxu0 0.0
    %496 = vmatpush1.msra.mxu0 0.0
    %497 = vmatprep.subr.mxu0 0.0
    %498 = vmatpush1.msra.mxu0 0.0
    %499 = vmatprep.subr.mxu0 0.0
    %500 = vmatpush1.msra.mxu0 0.0
    %501 = vmatprep.subr.mxu0 0.0
    %502 = vmatpush1.msra.mxu0 0.0
    %503 = vmatprep.subr.mxu0 0.0
    %504 = vmatpush1.msra.mxu0 0.0
    %505 = vmatprep.subr.mxu0 0.0
    %506 = vmatpush1.msra.mxu0 0.0
    %507 = vmatprep.subr.mxu0 0.0
    %508 = vmatpush1.msra.mxu0 0.0
    %509 = vmatprep.subr.mxu0 0.0
    %510 = vmatpush1.msra.mxu0 0.0
    %511 = vmatprep.subr.mxu0 0.0
    %512 = vmatpush1.msra.mxu0 0.0
    %513 = vmatprep.subr.mxu0 0.0
    %514 = vmatpush1.msra.mxu0 0.0
    %515 = vmatprep.subr.mxu0 0.0
    %516 = vmatpush1.msra.mxu0 0.0
    %517 = vmatprep.subr.mxu0 0.0
    %518 = vmatpush1.msra.mxu0 0.0
    %519 = vmatprep.subr.mxu0 0.0
    %520 = vmatpush1.msra.mxu0 0.0
    %521 = vmatprep.subr.mxu0 0.0
    %522 = vmatpush1.msra.mxu0 0.0
    %523 = vmatprep.mubr.f32.mxu0 0.0
    %524 = vmatmul.mubr.f32.gmra.mrb[0].mxu0 %v457
    %v525 = vpop.f32.mrb[0].mxu0
    %v526 = vadd.f32 %v453, %v525
    %v527 = vpop.f32.mrb[0].mxu0
    %528 = vdwg.mxu0
    %v529 = vxor.u32 %v526, 2147483648
    %v530 = vmul.f32 %v529, 1.442695
    %v531 = vpow.pop %v530
    %v532 = vadd.f32 %v531, 1.0
    %v533 = vrcp.pop %v532
    %v534 = vmul.f32 1.0, %v533
    %v535 = vtanh.pop %v526
    %v536 = vmul.f32 %v534, 0.0
    %538 = vrot.lane.b32.xlu0 %v535, 64
    %v539 = vpop.permute.xlu0 %538
    %v541 = vmul.f32 %v534, %v539
    %543 = vrot.lane.b32.xlu0 %v541, 32
    %v544 = vpop.permute.xlu0 %543
    %v546 = vadd.f32 %v536, %v544
    %v547 = vtanh.pop %v546
    %549 = vrot.lane.b32.xlu0 %v547, 64
    %v550 = vpop.permute.xlu0 %549
    %v552 = vmul.f32 %v534, %v550
    %vm553 = vcmask 125954
    %v554 = vsel %vm553, %v417, -inf
    %v555 = vrot.slane %v554, 4
    %v556 = vmax.f32 %v554, %v555
    %v557 = vrot.slane %v556, 2
    %v558 = vmax.f32 %v556, %v557
    %v559 = vrot.slane %v558, 1
    %v560 = vmax.f32 %v558, %v559
    %v561 = vsel %vm553, %v419, -inf
    %v562 = vrot.slane %v561, 4
    %v563 = vmax.f32 %v561, %v562
    %v564 = vrot.slane %v563, 2
    %v565 = vmax.f32 %v563, %v564
    %v566 = vrot.slane %v565, 1
    %v567 = vmax.f32 %v565, %v566
    %v570 = vsel %vm445, %v567, %v560
    %573 = vrot.lane.b32.xlu0 %v552, 48
    %v574 = vpop.permute.xlu0 %573
    %v576 = vsel %vm308, %v570, %v574
    %v578 = vsel %vm455, %v576, 0
    %580 = vmatprep.subr.mxu0 0.0
    %581 = vmatpush1.msra.mxu0 %v421
    %582 = vmatprep.subr.mxu0 0.0
    %583 = vmatpush1.msra.mxu0 %v422
    %584 = vmatprep.subr.mxu0 0.0
    %585 = vmatpush1.msra.mxu0 %v423
    %586 = vmatprep.subr.mxu0 0.0
    %587 = vmatpush1.msra.mxu0 %v424
    %588 = vmatprep.subr.mxu0 0.0
    %589 = vmatpush1.msra.mxu0 %v425
    %590 = vmatprep.subr.mxu0 0.0
    %591 = vmatpush1.msra.mxu0 %v426
    %592 = vmatprep.subr.mxu0 0.0
    %593 = vmatpush1.msra.mxu0 0.0
    %594 = vmatprep.subr.mxu0 0.0
    %595 = vmatpush1.msra.mxu0 0.0
    %596 = vmatprep.subr.mxu0 0.0
    %597 = vmatpush1.msra.mxu0 0.0
    %598 = vmatprep.subr.mxu0 0.0
    %599 = vmatpush1.msra.mxu0 0.0
    %600 = vmatprep.subr.mxu0 0.0
    %601 = vmatpush1.msra.mxu0 0.0
    %602 = vmatprep.subr.mxu0 0.0
    %603 = vmatpush1.msra.mxu0 0.0
    %604 = vmatprep.subr.mxu0 0.0
    %605 = vmatpush1.msra.mxu0 0.0
    %606 = vmatprep.subr.mxu0 0.0
    %607 = vmatpush1.msra.mxu0 0.0
    %608 = vmatprep.subr.mxu0 0.0
    %609 = vmatpush1.msra.mxu0 0.0
    %610 = vmatprep.subr.mxu0 0.0
    %611 = vmatpush1.msra.mxu0 0.0
    %612 = vmatprep.subr.mxu0 0.0
    %613 = vmatpush1.msra.mxu0 0.0
    %614 = vmatprep.subr.mxu0 0.0
    %615 = vmatpush1.msra.mxu0 0.0
    %616 = vmatprep.subr.mxu0 0.0
    %617 = vmatpush1.msra.mxu0 0.0
    %618 = vmatprep.subr.mxu0 0.0
    %619 = vmatpush1.msra.mxu0 0.0
    %620 = vmatprep.subr.mxu0 0.0
    %621 = vmatpush1.msra.mxu0 0.0
    %622 = vmatprep.subr.mxu0 0.0
    %623 = vmatpush1.msra.mxu0 0.0
    %624 = vmatprep.subr.mxu0 0.0
    %625 = vmatpush1.msra.mxu0 0.0
    %626 = vmatprep.subr.mxu0 0.0
    %627 = vmatpush1.msra.mxu0 0.0
    %628 = vmatprep.subr.mxu0 0.0
    %629 = vmatpush1.msra.mxu0 0.0
    %630 = vmatprep.subr.mxu0 0.0
    %631 = vmatpush1.msra.mxu0 0.0
    %632 = vmatprep.subr.mxu0 0.0
    %633 = vmatpush1.msra.mxu0 0.0
    %634 = vmatprep.subr.mxu0 0.0
    %635 = vmatpush1.msra.mxu0 0.0
    %636 = vmatprep.subr.mxu0 0.0
    %637 = vmatpush1.msra.mxu0 0.0
    %638 = vmatprep.subr.mxu0 0.0
    %639 = vmatpush1.msra.mxu0 0.0
    %640 = vmatprep.subr.mxu0 0.0
    %641 = vmatpush1.msra.mxu0 0.0
    %642 = vmatprep.subr.mxu0 0.0
    %643 = vmatpush1.msra.mxu0 0.0
    %644 = vmatprep.mubr.f32.mxu0 0.0
    %645 = vmatmul.mubr.f32.gmra.mrb[0].mxu0 %v578
    %v646 = vpop.f32.mrb[0].mxu0
    %v647 = vadd.f32 %v453, %v646
    %v648 = vpop.f32.mrb[0].mxu0
    %649 = vdwg.mxu0
    %v650 = vxor.u32 %v647, 2147483648
    %v651 = vmul.f32 %v650, 1.442695
    %v652 = vpow.pop %v651
    %v653 = vadd.f32 %v652, 1.0
    %v654 = vrcp.pop %v653
    %v655 = vmul.f32 1.0, %v654
    %v656 = vtanh.pop %v647
    %v657 = vmul.f32 %v655, %v546
    %659 = vrot.lane.b32.xlu0 %v656, 64
    %v660 = vpop.permute.xlu0 %659
    %v662 = vmul.f32 %v655, %v660
    %664 = vrot.lane.b32.xlu0 %v662, 32
    %v665 = vpop.permute.xlu0 %664
    %v667 = vadd.f32 %v657, %v665
    %v668 = vtanh.pop %v667
    %670 = vrot.lane.b32.xlu0 %v668, 64
    %v671 = vpop.permute.xlu0 %670
    %v673 = vmul.f32 %v655, %v671
    %vm674 = vcmask 128004
    %v675 = vsel %vm674, %v417, -inf
    %v676 = vrot.slane %v675, 4
    %v677 = vmax.f32 %v675, %v676
    %v678 = vrot.slane %v677, 2
    %v679 = vmax.f32 %v677, %v678
    %v680 = vrot.slane %v679, 1
    %v681 = vmax.f32 %v679, %v680
    %v682 = vsel %vm674, %v419, -inf
    %v683 = vrot.slane %v682, 4
    %v684 = vmax.f32 %v682, %v683
    %v685 = vrot.slane %v684, 2
    %v686 = vmax.f32 %v684, %v685
    %v687 = vrot.slane %v686, 1
    %v688 = vmax.f32 %v686, %v687
    %v691 = vsel %vm445, %v688, %v681
    %694 = vrot.lane.b32.xlu0 %v673, 48
    %v695 = vpop.permute.xlu0 %694
    %v697 = vsel %vm308, %v691, %v695
    %v699 = vsel %vm455, %v697, 0
    %701 = vmatprep.subr.mxu0 0.0
    %702 = vmatpush1.msra.mxu0 %v421
    %703 = vmatprep.subr.mxu0 0.0
    %704 = vmatpush1.msra.mxu0 %v422
    %705 = vmatprep.subr.mxu0 0.0
    %706 = vmatpush1.msra.mxu0 %v423
    %707 = vmatprep.subr.mxu0 0.0
    %708 = vmatpush1.msra.mxu0 %v424
    %709 = vmatprep.subr.mxu0 0.0
    %710 = vmatpush1.msra.mxu0 %v425
    %711 = vmatprep.subr.mxu0 0.0
    %712 = vmatpush1.msra.mxu0 %v426
    %713 = vmatprep.subr.mxu0 0.0
    %714 = vmatpush1.msra.mxu0 0.0
    %715 = vmatprep.subr.mxu0 0.0
    %716 = vmatpush1.msra.mxu0 0.0
    %717 = vmatprep.subr.mxu0 0.0
    %718 = vmatpush1.msra.mxu0 0.0
    %719 = vmatprep.subr.mxu0 0.0
    %720 = vmatpush1.msra.mxu0 0.0
    %721 = vmatprep.subr.mxu0 0.0
    %722 = vmatpush1.msra.mxu0 0.0
    %723 = vmatprep.subr.mxu0 0.0
    %724 = vmatpush1.msra.mxu0 0.0
    %725 = vmatprep.subr.mxu0 0.0
    %726 = vmatpush1.msra.mxu0 0.0
    %727 = vmatprep.subr.mxu0 0.0
    %728 = vmatpush1.msra.mxu0 0.0
    %729 = vmatprep.subr.mxu0 0.0
    %730 = vmatpush1.msra.mxu0 0.0
    %731 = vmatprep.subr.mxu0 0.0
    %732 = vmatpush1.msra.mxu0 0.0
    %733 = vmatprep.subr.mxu0 0.0
    %734 = vmatpush1.msra.mxu0 0.0
    %735 = vmatprep.subr.mxu0 0.0
    %736 = vmatpush1.msra.mxu0 0.0
    %737 = vmatprep.subr.mxu0 0.0
    %738 = vmatpush1.msra.mxu0 0.0
    %739 = vmatprep.subr.mxu0 0.0
    %740 = vmatpush1.msra.mxu0 0.0
    %741 = vmatprep.subr.mxu0 0.0
    %742 = vmatpush1.msra.mxu0 0.0
    %743 = vmatprep.subr.mxu0 0.0
    %744 = vmatpush1.msra.mxu0 0.0
    %745 = vmatprep.subr.mxu0 0.0
    %746 = vmatpush1.msra.mxu0 0.0
    %747 = vmatprep.subr.mxu0 0.0
    %748 = vmatpush1.msra.mxu0 0.0
    %749 = vmatprep.subr.mxu0 0.0
    %750 = vmatpush1.msra.mxu0 0.0
    %751 = vmatprep.subr.mxu0 0.0
    %752 = vmatpush1.msra.mxu0 0.0
    %753 = vmatprep.subr.mxu0 0.0
    %754 = vmatpush1.msra.mxu0 0.0
    %755 = vmatprep.subr.mxu0 0.0
    %756 = vmatpush1.msra.mxu0 0.0
    %757 = vmatprep.subr.mxu0 0.0
    %758 = vmatpush1.msra.mxu0 0.0
    %759 = vmatprep.subr.mxu0 0.0
    %760 = vmatpush1.msra.mxu0 0.0
    %761 = vmatprep.subr.mxu0 0.0
    %762 = vmatpush1.msra.mxu0 0.0
    %763 = vmatprep.subr.mxu0 0.0
    %764 = vmatpush1.msra.mxu0 0.0
    %765 = vmatprep.mubr.f32.mxu0 0.0
    %766 = vmatmul.mubr.f32.gmra.mrb[0].mxu0 %v699
    %v767 = vpop.f32.mrb[0].mxu0
    %v768 = vadd.f32 %v453, %v767
    %v769 = vpop.f32.mrb[0].mxu0
    %770 = vdwg.mxu0
    %v771 = vxor.u32 %v768, 2147483648
    %v772 = vmul.f32 %v771, 1.442695
    %v773 = vpow.pop %v772
    %v774 = vadd.f32 %v773, 1.0
    %v775 = vrcp.pop %v774
    %v776 = vmul.f32 1.0, %v775
    %v777 = vtanh.pop %v768
    %v778 = vmul.f32 %v776, %v667
    %780 = vrot.lane.b32.xlu0 %v777, 64
    %v781 = vpop.permute.xlu0 %780
    %v783 = vmul.f32 %v776, %v781
    %785 = vrot.lane.b32.xlu0 %v783, 32
    %v786 = vpop.permute.xlu0 %785
    %v788 = vadd.f32 %v778, %v786
    %v789 = vtanh.pop %v788
    %791 = vrot.lane.b32.xlu0 %v789, 64
    %v792 = vpop.permute.xlu0 %791
    %v794 = vmul.f32 %v776, %v792
    %vm795 = vcmask 130054
    %v796 = vsel %vm795, %v417, -inf
    %v797 = vrot.slane %v796, 4
    %v798 = vmax.f32 %v796, %v797
    %v799 = vrot.slane %v798, 2
    %v800 = vmax.f32 %v798, %v799
    %v801 = vrot.slane %v800, 1
    %v802 = vmax.f32 %v800, %v801
    %v803 = vsel %vm795, %v419, -inf
    %v804 = vrot.slane %v803, 4
    %v805 = vmax.f32 %v803, %v804
    %v806 = vrot.slane %v805, 2
    %v807 = vmax.f32 %v805, %v806
    %v808 = vrot.slane %v807, 1
    %v809 = vmax.f32 %v807, %v808
    %v812 = vsel %vm445, %v809, %v802
    %815 = vrot.lane.b32.xlu0 %v794, 48
    %v816 = vpop.permute.xlu0 %815
    %v818 = vsel %vm308, %v812, %v816
    %v820 = vsel %vm455, %v818, 0
    %822 = vmatprep.subr.mxu0 0.0
    %823 = vmatpush1.msra.mxu0 %v421
    %824 = vmatprep.subr.mxu0 0.0
    %825 = vmatpush1.msra.mxu0 %v422
    %826 = vmatprep.subr.mxu0 0.0
    %827 = vmatpush1.msra.mxu0 %v423
    %828 = vmatprep.subr.mxu0 0.0
    %829 = vmatpush1.msra.mxu0 %v424
    %830 = vmatprep.subr.mxu0 0.0
    %831 = vmatpush1.msra.mxu0 %v425
    %832 = vmatprep.subr.mxu0 0.0
    %833 = vmatpush1.msra.mxu0 %v426
    %834 = vmatprep.subr.mxu0 0.0
    %835 = vmatpush1.msra.mxu0 0.0
    %836 = vmatprep.subr.mxu0 0.0
    %837 = vmatpush1.msra.mxu0 0.0
    %838 = vmatprep.subr.mxu0 0.0
    %839 = vmatpush1.msra.mxu0 0.0
    %840 = vmatprep.subr.mxu0 0.0
    %841 = vmatpush1.msra.mxu0 0.0
    %842 = vmatprep.subr.mxu0 0.0
    %843 = vmatpush1.msra.mxu0 0.0
    %844 = vmatprep.subr.mxu0 0.0
    %845 = vmatpush1.msra.mxu0 0.0
    %846 = vmatprep.subr.mxu0 0.0
    %847 = vmatpush1.msra.mxu0 0.0
    %848 = vmatprep.subr.mxu0 0.0
    %849 = vmatpush1.msra.mxu0 0.0
    %850 = vmatprep.subr.mxu0 0.0
    %851 = vmatpush1.msra.mxu0 0.0
    %852 = vmatprep.subr.mxu0 0.0
    %853 = vmatpush1.msra.mxu0 0.0
    %854 = vmatprep.subr.mxu0 0.0
    %855 = vmatpush1.msra.mxu0 0.0
    %856 = vmatprep.subr.mxu0 0.0
    %857 = vmatpush1.msra.mxu0 0.0
    %858 = vmatprep.subr.mxu0 0.0
    %859 = vmatpush1.msra.mxu0 0.0
    %860 = vmatprep.subr.mxu0 0.0
    %861 = vmatpush1.msra.mxu0 0.0
    %862 = vmatprep.subr.mxu0 0.0
    %863 = vmatpush1.msra.mxu0 0.0
    %864 = vmatprep.subr.mxu0 0.0
    %865 = vmatpush1.msra.mxu0 0.0
    %866 = vmatprep.subr.mxu0 0.0
    %867 = vmatpush1.msra.mxu0 0.0
    %868 = vmatprep.subr.mxu0 0.0
    %869 = vmatpush1.msra.mxu0 0.0
    %870 = vmatprep.subr.mxu0 0.0
    %871 = vmatpush1.msra.mxu0 0.0
    %872 = vmatprep.subr.mxu0 0.0
    %873 = vmatpush1.msra.mxu0 0.0
    %874 = vmatprep.subr.mxu0 0.0
    %875 = vmatpush1.msra.mxu0 0.0
    %876 = vmatprep.subr.mxu0 0.0
    %877 = vmatpush1.msra.mxu0 0.0
    %878 = vmatprep.subr.mxu0 0.0
    %879 = vmatpush1.msra.mxu0 0.0
    %880 = vmatprep.subr.mxu0 0.0
    %881 = vmatpush1.msra.mxu0 0.0
    %882 = vmatprep.subr.mxu0 0.0
    %883 = vmatpush1.msra.mxu0 0.0
    %884 = vmatprep.subr.mxu0 0.0
    %885 = vmatpush1.msra.mxu0 0.0
    %886 = vmatprep.mubr.f32.mxu0 0.0
    %887 = vmatmul.mubr.f32.gmra.mrb[0].mxu0 %v820
    %v888 = vpop.f32.mrb[0].mxu0
    %v889 = vadd.f32 %v453, %v888
    %v890 = vpop.f32.mrb[0].mxu0
    %891 = vdwg.mxu0
    %v892 = vxor.u32 %v889, 2147483648
    %v893 = vmul.f32 %v892, 1.442695
    %v894 = vpow.pop %v893
    %v895 = vadd.f32 %v894, 1.0
    %v896 = vrcp.pop %v895
    %v897 = vmul.f32 1.0, %v896
    %v898 = vtanh.pop %v889
    %v899 = vmul.f32 %v897, %v788
    %901 = vrot.lane.b32.xlu0 %v898, 64
    %v902 = vpop.permute.xlu0 %901
    %v904 = vmul.f32 %v897, %v902
    %906 = vrot.lane.b32.xlu0 %v904, 32
    %v907 = vpop.permute.xlu0 %906
    %v909 = vadd.f32 %v899, %v907
    %v910 = vtanh.pop %v909
    %912 = vrot.lane.b32.xlu0 %v910, 64
    %v913 = vpop.permute.xlu0 %912
    %v915 = vmul.f32 %v897, %v913
    %v916 = vsel %vm428, %v418, -inf
    %v917 = vrot.slane %v916, 4
    %v918 = vmax.f32 %v916, %v917
    %v919 = vrot.slane %v918, 2
    %v920 = vmax.f32 %v918, %v919
    %v921 = vrot.slane %v920, 1
    %v922 = vmax.f32 %v920, %v921
    %v923 = vsel %vm428, %v420, -inf
    %v924 = vrot.slane %v923, 4
    %v925 = vmax.f32 %v923, %v924
    %v926 = vrot.slane %v925, 2
    %v927 = vmax.f32 %v925, %v926
    %v928 = vrot.slane %v927, 1
    %v929 = vmax.f32 %v927, %v928
    %v932 = vsel %vm445, %v929, %v922
    %935 = vrot.lane.b32.xlu0 %v915, 48
    %v936 = vpop.permute.xlu0 %935
    %v938 = vsel %vm308, %v932, %v936
    %v940 = vsel %vm455, %v938, 0
    %942 = vmatprep.subr.mxu0 0.0
    %943 = vmatpush1.msra.mxu0 %v421
    %944 = vmatprep.subr.mxu0 0.0
    %945 = vmatpush1.msra.mxu0 %v422
    %946 = vmatprep.subr.mxu0 0.0
    %947 = vmatpush1.msra.mxu0 %v423
    %948 = vmatprep.subr.mxu0 0.0
    %949 = vmatpush1.msra.mxu0 %v424
    %950 = vmatprep.subr.mxu0 0.0
    %951 = vmatpush1.msra.mxu0 %v425
    %952 = vmatprep.subr.mxu0 0.0
    %953 = vmatpush1.msra.mxu0 %v426
    %954 = vmatprep.subr.mxu0 0.0
    %955 = vmatpush1.msra.mxu0 0.0
    %956 = vmatprep.subr.mxu0 0.0
    %957 = vmatpush1.msra.mxu0 0.0
    %958 = vmatprep.subr.mxu0 0.0
    %959 = vmatpush1.msra.mxu0 0.0
    %960 = vmatprep.subr.mxu0 0.0
    %961 = vmatpush1.msra.mxu0 0.0
    %962 = vmatprep.subr.mxu0 0.0
    %963 = vmatpush1.msra.mxu0 0.0
    %964 = vmatprep.subr.mxu0 0.0
    %965 = vmatpush1.msra.mxu0 0.0
    %966 = vmatprep.subr.mxu0 0.0
    %967 = vmatpush1.msra.mxu0 0.0
    %968 = vmatprep.subr.mxu0 0.0
    %969 = vmatpush1.msra.mxu0 0.0
    %970 = vmatprep.subr.mxu0 0.0
    %971 = vmatpush1.msra.mxu0 0.0
    %972 = vmatprep.subr.mxu0 0.0
    %973 = vmatpush1.msra.mxu0 0.0
    %974 = vmatprep.subr.mxu0 0.0
    %975 = vmatpush1.msra.mxu0 0.0
    %976 = vmatprep.subr.mxu0 0.0
    %977 = vmatpush1.msra.mxu0 0.0
    %978 = vmatprep.subr.mxu0 0.0
    %979 = vmatpush1.msra.mxu0 0.0
    %980 = vmatprep.subr.mxu0 0.0
    %981 = vmatpush1.msra.mxu0 0.0
    %982 = vmatprep.subr.mxu0 0.0
    %983 = vmatpush1.msra.mxu0 0.0
    %984 = vmatprep.subr.mxu0 0.0
    %985 = vmatpush1.msra.mxu0 0.0
    %986 = vmatprep.subr.mxu0 0.0
    %987 = vmatpush1.msra.mxu0 0.0
    %988 = vmatprep.subr.mxu0 0.0
    %989 = vmatpush1.msra.mxu0 0.0
    %990 = vmatprep.subr.mxu0 0.0
    %991 = vmatpush1.msra.mxu0 0.0
    %992 = vmatprep.subr.mxu0 0.0
    %993 = vmatpush1.msra.mxu0 0.0
    %994 = vmatprep.subr.mxu0 0.0
    %995 = vmatpush1.msra.mxu0 0.0
    %996 = vmatprep.subr.mxu0 0.0
    %997 = vmatpush1.msra.mxu0 0.0
    %998 = vmatprep.subr.mxu0 0.0
    %999 = vmatpush1.msra.mxu0 0.0
    %1000 = vmatprep.subr.mxu0 0.0
    %1001 = vmatpush1.msra.mxu0 0.0
    %1002 = vmatprep.subr.mxu0 0.0
    %1003 = vmatpush1.msra.mxu0 0.0
    %1004 = vmatprep.subr.mxu0 0.0
    %1005 = vmatpush1.msra.mxu0 0.0
    %1006 = vmatprep.mubr.f32.mxu0 0.0
    %1007 = vmatmul.mubr.f32.gmra.mrb[0].mxu0 %v940
    %v1008 = vpop.f32.mrb[0].mxu0
    %v1009 = vadd.f32 %v453, %v1008
    %v1010 = vpop.f32.mrb[0].mxu0
    %1011 = vdwg.mxu0
    %v1012 = vxor.u32 %v1009, 2147483648
    %v1013 = vmul.f32 %v1012, 1.442695
    %v1014 = vpow.pop %v1013
    %v1015 = vadd.f32 %v1014, 1.0
    %v1016 = vrcp.pop %v1015
    %v1017 = vmul.f32 1.0, %v1016
    %v1018 = vtanh.pop %v1009
    %v1019 = vmul.f32 %v1017, %v909
    %1021 = vrot.lane.b32.xlu0 %v1018, 64
    %v1022 = vpop.permute.xlu0 %1021
    %v1024 = vmul.f32 %v1017, %v1022
    %1026 = vrot.lane.b32.xlu0 %v1024, 32
    %v1027 = vpop.permute.xlu0 %1026
    %v1029 = vadd.f32 %v1019, %v1027
    %v1030 = vtanh.pop %v1029
    %1032 = vrot.lane.b32.xlu0 %v1030, 64
    %v1033 = vpop.permute.xlu0 %1032
    %v1035 = vmul.f32 %v1017, %v1033
    %v1036 = vsel %vm553, %v418, -inf
    %v1037 = vrot.slane %v1036, 4
    %v1038 = vmax.f32 %v1036, %v1037
    %v1039 = vrot.slane %v1038, 2
    %v1040 = vmax.f32 %v1038, %v1039
    %v1041 = vrot.slane %v1040, 1
    %v1042 = vmax.f32 %v1040, %v1041
    %v1043 = vsel %vm553, %v420, -inf
    %v1044 = vrot.slane %v1043, 4
    %v1045 = vmax.f32 %v1043, %v1044
    %v1046 = vrot.slane %v1045, 2
    %v1047 = vmax.f32 %v1045, %v1046
    %v1048 = vrot.slane %v1047, 1
    %v1049 = vmax.f32 %v1047, %v1048
    %v1052 = vsel %vm445, %v1049, %v1042
    %1055 = vrot.lane.b32.xlu0 %v1035, 48
    %v1056 = vpop.permute.xlu0 %1055
    %v1058 = vsel %vm308, %v1052, %v1056
    %v1060 = vsel %vm455, %v1058, 0
    %1062 = vmatprep.subr.mxu0 0.0
    %1063 = vmatpush1.msra.mxu0 %v421
    %1064 = vmatprep.subr.mxu0 0.0
    %1065 = vmatpush1.msra.mxu0 %v422
    %1066 = vmatprep.subr.mxu0 0.0
    %1067 = vmatpush1.msra.mxu0 %v423
    %1068 = vmatprep.subr.mxu0 0.0
    %1069 = vmatpush1.msra.mxu0 %v424
    %1070 = vmatprep.subr.mxu0 0.0
    %1071 = vmatpush1.msra.mxu0 %v425
    %1072 = vmatprep.subr.mxu0 0.0
    %1073 = vmatpush1.msra.mxu0 %v426
    %1074 = vmatprep.subr.mxu0 0.0
    %1075 = vmatpush1.msra.mxu0 0.0
    %1076 = vmatprep.subr.mxu0 0.0
    %1077 = vmatpush1.msra.mxu0 0.0
    %1078 = vmatprep.subr.mxu0 0.0
    %1079 = vmatpush1.msra.mxu0 0.0
    %1080 = vmatprep.subr.mxu0 0.0
    %1081 = vmatpush1.msra.mxu0 0.0
    %1082 = vmatprep.subr.mxu0 0.0
    %1083 = vmatpush1.msra.mxu0 0.0
    %1084 = vmatprep.subr.mxu0 0.0
    %1085 = vmatpush1.msra.mxu0 0.0
    %1086 = vmatprep.subr.mxu0 0.0
    %1087 = vmatpush1.msra.mxu0 0.0
    %1088 = vmatprep.subr.mxu0 0.0
    %1089 = vmatpush1.msra.mxu0 0.0
    %1090 = vmatprep.subr.mxu0 0.0
    %1091 = vmatpush1.msra.mxu0 0.0
    %1092 = vmatprep.subr.mxu0 0.0
    %1093 = vmatpush1.msra.mxu0 0.0
    %1094 = vmatprep.subr.mxu0 0.0
    %1095 = vmatpush1.msra.mxu0 0.0
    %1096 = vmatprep.subr.mxu0 0.0
    %1097 = vmatpush1.msra.mxu0 0.0
    %1098 = vmatprep.subr.mxu0 0.0
    %1099 = vmatpush1.msra.mxu0 0.0
    %1100 = vmatprep.subr.mxu0 0.0
    %1101 = vmatpush1.msra.mxu0 0.0
    %1102 = vmatprep.subr.mxu0 0.0
    %1103 = vmatpush1.msra.mxu0 0.0
    %1104 = vmatprep.subr.mxu0 0.0
    %1105 = vmatpush1.msra.mxu0 0.0
    %1106 = vmatprep.subr.mxu0 0.0
    %1107 = vmatpush1.msra.mxu0 0.0
    %1108 = vmatprep.subr.mxu0 0.0
    %1109 = vmatpush1.msra.mxu0 0.0
    %1110 = vmatprep.subr.mxu0 0.0
    %1111 = vmatpush1.msra.mxu0 0.0
    %1112 = vmatprep.subr.mxu0 0.0
    %1113 = vmatpush1.msra.mxu0 0.0
    %1114 = vmatprep.subr.mxu0 0.0
    %1115 = vmatpush1.msra.mxu0 0.0
    %1116 = vmatprep.subr.mxu0 0.0
    %1117 = vmatpush1.msra.mxu0 0.0
    %1118 = vmatprep.subr.mxu0 0.0
    %1119 = vmatpush1.msra.mxu0 0.0
    %1120 = vmatprep.subr.mxu0 0.0
    %1121 = vmatpush1.msra.mxu0 0.0
    %1122 = vmatprep.subr.mxu0 0.0
    %1123 = vmatpush1.msra.mxu0 0.0
    %1124 = vmatprep.subr.mxu0 0.0
    %1125 = vmatpush1.msra.mxu0 0.0
    %1126 = vmatprep.mubr.f32.mxu0 0.0
    %1127 = vmatmul.mubr.f32.gmra.mrb[0].mxu0 %v1060
    %v1128 = vpop.f32.mrb[0].mxu0
    %v1129 = vadd.f32 %v453, %v1128
    %v1130 = vpop.f32.mrb[0].mxu0
    %1131 = vdwg.mxu0
    %v1132 = vxor.u32 %v1129, 2147483648
    %v1133 = vmul.f32 %v1132, 1.442695
    %v1134 = vpow.pop %v1133
    %v1135 = vadd.f32 %v1134, 1.0
    %v1136 = vrcp.pop %v1135
    %v1137 = vmul.f32 1.0, %v1136
    %v1138 = vtanh.pop %v1129
    %v1139 = vmul.f32 %v1137, %v1029
    %1141 = vrot.lane.b32.xlu0 %v1138, 64
    %v1142 = vpop.permute.xlu0 %1141
    %v1144 = vmul.f32 %v1137, %v1142
    %1146 = vrot.lane.b32.xlu0 %v1144, 32
    %v1147 = vpop.permute.xlu0 %1146
    %v1149 = vadd.f32 %v1139, %v1147
    %v1150 = vtanh.pop %v1149
    %1152 = vrot.lane.b32.xlu0 %v1150, 64
    %v1153 = vpop.permute.xlu0 %1152
    %v1155 = vmul.f32 %v1137, %v1153
    %v1156 = vsel %vm674, %v418, -inf
    %v1157 = vrot.slane %v1156, 4
    %v1158 = vmax.f32 %v1156, %v1157
    %v1159 = vrot.slane %v1158, 2
    %v1160 = vmax.f32 %v1158, %v1159
    %v1161 = vrot.slane %v1160, 1
    %v1162 = vmax.f32 %v1160, %v1161
    %v1163 = vsel %vm674, %v420, -inf
    %v1164 = vrot.slane %v1163, 4
    %v1165 = vmax.f32 %v1163, %v1164
    %v1166 = vrot.slane %v1165, 2
    %v1167 = vmax.f32 %v1165, %v1166
    %v1168 = vrot.slane %v1167, 1
    %v1169 = vmax.f32 %v1167, %v1168
    %v1172 = vsel %vm445, %v1169, %v1162
    %1175 = vrot.lane.b32.xlu0 %v1155, 48
    %v1176 = vpop.permute.xlu0 %1175
    %v1178 = vsel %vm308, %v1172, %v1176
    %v1180 = vsel %vm455, %v1178, 0
    %1182 = vmatprep.subr.mxu0 0.0
    %1183 = vmatpush1.msra.mxu0 %v421
    %1184 = vmatprep.subr.mxu0 0.0
    %1185 = vmatpush1.msra.mxu0 %v422
    %1186 = vmatprep.subr.mxu0 0.0
    %1187 = vmatpush1.msra.mxu0 %v423
    %1188 = vmatprep.subr.mxu0 0.0
    %1189 = vmatpush1.msra.mxu0 %v424
    %1190 = vmatprep.subr.mxu0 0.0
    %1191 = vmatpush1.msra.mxu0 %v425
    %1192 = vmatprep.subr.mxu0 0.0
    %1193 = vmatpush1.msra.mxu0 %v426
    %1194 = vmatprep.subr.mxu0 0.0
    %1195 = vmatpush1.msra.mxu0 0.0
    %1196 = vmatprep.subr.mxu0 0.0
    %1197 = vmatpush1.msra.mxu0 0.0
    %1198 = vmatprep.subr.mxu0 0.0
    %1199 = vmatpush1.msra.mxu0 0.0
    %1200 = vmatprep.subr.mxu0 0.0
    %1201 = vmatpush1.msra.mxu0 0.0
    %1202 = vmatprep.subr.mxu0 0.0
    %1203 = vmatpush1.msra.mxu0 0.0
    %1204 = vmatprep.subr.mxu0 0.0
    %1205 = vmatpush1.msra.mxu0 0.0
    %1206 = vmatprep.subr.mxu0 0.0
    %1207 = vmatpush1.msra.mxu0 0.0
    %1208 = vmatprep.subr.mxu0 0.0
    %1209 = vmatpush1.msra.mxu0 0.0
    %1210 = vmatprep.subr.mxu0 0.0
    %1211 = vmatpush1.msra.mxu0 0.0
    %1212 = vmatprep.subr.mxu0 0.0
    %1213 = vmatpush1.msra.mxu0 0.0
    %1214 = vmatprep.subr.mxu0 0.0
    %1215 = vmatpush1.msra.mxu0 0.0
    %1216 = vmatprep.subr.mxu0 0.0
    %1217 = vmatpush1.msra.mxu0 0.0
    %1218 = vmatprep.subr.mxu0 0.0
    %1219 = vmatpush1.msra.mxu0 0.0
    %1220 = vmatprep.subr.mxu0 0.0
    %1221 = vmatpush1.msra.mxu0 0.0
    %1222 = vmatprep.subr.mxu0 0.0
    %1223 = vmatpush1.msra.mxu0 0.0
    %1224 = vmatprep.subr.mxu0 0.0
    %1225 = vmatpush1.msra.mxu0 0.0
    %1226 = vmatprep.subr.mxu0 0.0
    %1227 = vmatpush1.msra.mxu0 0.0
    %1228 = vmatprep.subr.mxu0 0.0
    %1229 = vmatpush1.msra.mxu0 0.0
    %1230 = vmatprep.subr.mxu0 0.0
    %1231 = vmatpush1.msra.mxu0 0.0
    %1232 = vmatprep.subr.mxu0 0.0
    %1233 = vmatpush1.msra.mxu0 0.0
    %1234 = vmatprep.subr.mxu0 0.0
    %1235 = vmatpush1.msra.mxu0 0.0
    %1236 = vmatprep.subr.mxu0 0.0
    %1237 = vmatpush1.msra.mxu0 0.0
    %1238 = vmatprep.subr.mxu0 0.0
    %1239 = vmatpush1.msra.mxu0 0.0
    %1240 = vmatprep.subr.mxu0 0.0
    %1241 = vmatpush1.msra.mxu0 0.0
    %1242 = vmatprep.subr.mxu0 0.0
    %1243 = vmatpush1.msra.mxu0 0.0
    %1244 = vmatprep.subr.mxu0 0.0
    %1245 = vmatpush1.msra.mxu0 0.0
    %1246 = vmatprep.mubr.f32.mxu0 0.0
    %1247 = vmatmul.mubr.f32.gmra.mrb[0].mxu0 %v1180
    %v1248 = vpop.f32.mrb[0].mxu0
    %v1249 = vadd.f32 %v453, %v1248
    %v1250 = vpop.f32.mrb[0].mxu0
    %1251 = vdwg.mxu0
    %v1252 = vxor.u32 %v1249, 2147483648
    %v1253 = vmul.f32 %v1252, 1.442695
    %v1254 = vpow.pop %v1253
    %v1255 = vadd.f32 %v1254, 1.0
    %v1256 = vrcp.pop %v1255
    %v1257 = vmul.f32 1.0, %v1256
    %v1258 = vtanh.pop %v1249
    %v1259 = vmul.f32 %v1257, %v1149
    %1261 = vrot.lane.b32.xlu0 %v1258, 64
    %v1262 = vpop.permute.xlu0 %1261
    %v1264 = vmul.f32 %v1257, %v1262
    %1266 = vrot.lane.b32.xlu0 %v1264, 32
    %v1267 = vpop.permute.xlu0 %1266
    %v1269 = vadd.f32 %v1259, %v1267
    %v1270 = vtanh.pop %v1269
    %1272 = vrot.lane.b32.xlu0 %v1270, 64
    %v1273 = vpop.permute.xlu0 %1272
    %v1275 = vmul.f32 %v1257, %v1273
    %v1276 = vsel %vm795, %v418, -inf
    %v1277 = vrot.slane %v1276, 4
    %v1278 = vmax.f32 %v1276, %v1277
    %v1279 = vrot.slane %v1278, 2
    %v1280 = vmax.f32 %v1278, %v1279
    %v1281 = vrot.slane %v1280, 1
    %v1282 = vmax.f32 %v1280, %v1281
    %v1283 = vsel %vm795, %v420, -inf
    %v1284 = vrot.slane %v1283, 4
    %v1285 = vmax.f32 %v1283, %v1284
    %v1286 = vrot.slane %v1285, 2
    %v1287 = vmax.f32 %v1285, %v1286
    %v1288 = vrot.slane %v1287, 1
    %v1289 = vmax.f32 %v1287, %v1288
    %v1292 = vsel %vm445, %v1289, %v1282
    %1295 = vrot.lane.b32.xlu0 %v1275, 48
    %v1296 = vpop.permute.xlu0 %1295
    %v1298 = vsel %vm308, %v1292, %v1296
    %v1300 = vsel %vm455, %v1298, 0
    %1302 = vmatprep.subr.mxu0 0.0
    %1303 = vmatpush1.msra.mxu0 %v421
    %1304 = vmatprep.subr.mxu0 0.0
    %1305 = vmatpush1.msra.mxu0 %v422
    %1306 = vmatprep.subr.mxu0 0.0
    %1307 = vmatpush1.msra.mxu0 %v423
    %1308 = vmatprep.subr.mxu0 0.0
    %1309 = vmatpush1.msra.mxu0 %v424
    %1310 = vmatprep.subr.mxu0 0.0
    %1311 = vmatpush1.msra.mxu0 %v425
    %1312 = vmatprep.subr.mxu0 0.0
    %1313 = vmatpush1.msra.mxu0 %v426
    %1314 = vmatprep.subr.mxu0 0.0
    %1315 = vmatpush1.msra.mxu0 0.0
    %1316 = vmatprep.subr.mxu0 0.0
    %1317 = vmatpush1.msra.mxu0 0.0
    %1318 = vmatprep.subr.mxu0 0.0
    %1319 = vmatpush1.msra.mxu0 0.0
    %1320 = vmatprep.subr.mxu0 0.0
    %1321 = vmatpush1.msra.mxu0 0.0
    %1322 = vmatprep.subr.mxu0 0.0
    %1323 = vmatpush1.msra.mxu0 0.0
    %1324 = vmatprep.subr.mxu0 0.0
    %1325 = vmatpush1.msra.mxu0 0.0
    %1326 = vmatprep.subr.mxu0 0.0
    %1327 = vmatpush1.msra.mxu0 0.0
    %1328 = vmatprep.subr.mxu0 0.0
    %1329 = vmatpush1.msra.mxu0 0.0
    %1330 = vmatprep.subr.mxu0 0.0
    %1331 = vmatpush1.msra.mxu0 0.0
    %1332 = vmatprep.subr.mxu0 0.0
    %1333 = vmatpush1.msra.mxu0 0.0
    %1334 = vmatprep.subr.mxu0 0.0
    %1335 = vmatpush1.msra.mxu0 0.0
    %1336 = vmatprep.subr.mxu0 0.0
    %1337 = vmatpush1.msra.mxu0 0.0
    %1338 = vmatprep.subr.mxu0 0.0
    %1339 = vmatpush1.msra.mxu0 0.0
    %1340 = vmatprep.subr.mxu0 0.0
    %1341 = vmatpush1.msra.mxu0 0.0
    %1342 = vmatprep.subr.mxu0 0.0
    %1343 = vmatpush1.msra.mxu0 0.0
    %1344 = vmatprep.subr.mxu0 0.0
    %1345 = vmatpush1.msra.mxu0 0.0
    %1346 = vmatprep.subr.mxu0 0.0
    %1347 = vmatpush1.msra.mxu0 0.0
    %1348 = vmatprep.subr.mxu0 0.0
    %1349 = vmatpush1.msra.mxu0 0.0
    %1350 = vmatprep.subr.mxu0 0.0
    %1351 = vmatpush1.msra.mxu0 0.0
    %1352 = vmatprep.subr.mxu0 0.0
    %1353 = vmatpush1.msra.mxu0 0.0
    %1354 = vmatprep.subr.mxu0 0.0
    %1355 = vmatpush1.msra.mxu0 0.0
    %1356 = vmatprep.subr.mxu0 0.0
    %1357 = vmatpush1.msra.mxu0 0.0
    %1358 = vmatprep.subr.mxu0 0.0
    %1359 = vmatpush1.msra.mxu0 0.0
    %1360 = vmatprep.subr.mxu0 0.0
    %1361 = vmatpush1.msra.mxu0 0.0
    %1362 = vmatprep.subr.mxu0 0.0
    %1363 = vmatpush1.msra.mxu0 0.0
    %1364 = vmatprep.subr.mxu0 0.0
    %1365 = vmatpush1.msra.mxu0 0.0
    %1366 = vmatprep.mubr.f32.mxu0 0.0
    %1367 = vmatmul.mubr.f32.gmra.mrb[0].mxu0 %v1300
    %v1368 = vpop.f32.mrb[0].mxu0
    %v1369 = vadd.f32 %v453, %v1368
    %v1370 = vpop.f32.mrb[0].mxu0
    %1371 = vdwg.mxu0
    %v1372 = vxor.u32 %v1369, 2147483648
    %v1373 = vmul.f32 %v1372, 1.442695
    %v1374 = vpow.pop %v1373
    %v1375 = vadd.f32 %v1374, 1.0
    %v1376 = vrcp.pop %v1375
    %v1377 = vmul.f32 1.0, %v1376
    %v1378 = vtanh.pop %v1369
    %v1379 = vmul.f32 %v1377, %v1269
    %1381 = vrot.lane.b32.xlu0 %v1378, 64
    %v1382 = vpop.permute.xlu0 %1381
    %v1384 = vmul.f32 %v1377, %v1382
    %1386 = vrot.lane.b32.xlu0 %v1384, 32
    %v1387 = vpop.permute.xlu0 %1386
    %v1389 = vadd.f32 %v1379, %v1387
    %v1390 = vtanh.pop %v1389
    %1392 = vrot.lane.b32.xlu0 %v1390, 64
    %v1393 = vpop.permute.xlu0 %1392
    %v1395 = vmul.f32 %v1377, %v1393
    %1396 = vrot.lane.b32.xlu0 %v552, 32
    %v1397 = vpop.permute.xlu0 %1396
    %1399 = vrot.lane.b32.xlu0 %v673, 64
    %v1400 = vpop.permute.xlu0 %1399
    %1402 = vrot.lane.b32.xlu0 %v794, 96
    %v1403 = vpop.permute.xlu0 %1402
    %1405 = vrot.lane.b32.xlu0 %v1035, 32
    %v1406 = vpop.permute.xlu0 %1405
    %1408 = vrot.lane.b32.xlu0 %v1155, 64
    %v1409 = vpop.permute.xlu0 %1408
    %1411 = vrot.lane.b32.xlu0 %v1275, 96
    %v1412 = vpop.permute.xlu0 %1411
    %vm1414 = vcmask 261120
    %v1415 = vsel %vm1414, %v1397, %v1400
    %vm1416 = vcmask 523264
    %v1417 = vsel %vm1416, %v1415, %v1403
    %vm1418 = vcmask 785408
    %v1419 = vsel %vm1418, %v1417, %v915
    %v1420 = vsel %vm1414, %v1406, %v1409
    %v1421 = vsel %vm1416, %v1420, %v1412
    %v1422 = vsel %vm1418, %v1421, %v1395
    %v1425 = vcombine.low %v1419, %v1422
    %v1427 = vunpack.c.l.s4 1983009808
    %v1428 = vunpack.c.0.s8 %v1427
    %v1429 = vlaneseq
    %v1430 = vshrl.u32 %v1429, 7
    %v1431 = vsub.s32 %v1428, %v1430
    %v1432 = vrot.slane %v1425, %v1431
    %1434 = vst [vmem:[%s9] sm:$0xf] %v1432
    %v1435 = vld [vmem:[%s7] sm:$0xff]
    %v1436 = vld [vmem:[%s7 + $0x8] sm:$0xff]
    %v1437 = vld [vmem:[%s7 + $0x10] sm:$0xff]
    %v1438 = vld [vmem:[%s7 + $0x18] sm:$0xff]
    %v1439 = vld [vmem:[%s8] sm:$0x1]
    %v1441 = vlaneseq
    %v1442 = vshrl.u32 %v1441, 7
    %v1443 = vsub.s32 0, %v1442
    %v1444 = vrot.slane %v1439, %v1443
    %1447 = vrot.lane.b32.xlu0 %v1395, 32
    %v1448 = vpop.permute.xlu0 %1447
    %v1449 = vsel %vm1414, %v1448, 0
    %1451 = vmatprep.subr.mxu0 0.0
    %1452 = vmatpush1.msra.mxu0 %v1435
    %1453 = vmatprep.subr.mxu0 0.0
    %1454 = vmatpush1.msra.mxu0 %v1436
    %1455 = vmatprep.subr.mxu0 0.0
    %1456 = vmatpush1.msra.mxu0 %v1437
    %1457 = vmatprep.subr.mxu0 0.0
    %1458 = vmatpush1.msra.mxu0 %v1438
    %1459 = vmatprep.subr.mxu0 0.0
    %1460 = vmatpush1.msra.mxu0 0.0
    %1461 = vmatprep.subr.mxu0 0.0
    %1462 = vmatpush1.msra.mxu0 0.0
    %1463 = vmatprep.subr.mxu0 0.0
    %1464 = vmatpush1.msra.mxu0 0.0
    %1465 = vmatprep.subr.mxu0 0.0
    %1466 = vmatpush1.msra.mxu0 0.0
    %1467 = vmatprep.subr.mxu0 0.0
    %1468 = vmatpush1.msra.mxu0 0.0
    %1469 = vmatprep.subr.mxu0 0.0
    %1470 = vmatpush1.msra.mxu0 0.0
    %1471 = vmatprep.subr.mxu0 0.0
    %1472 = vmatpush1.msra.mxu0 0.0
    %1473 = vmatprep.subr.mxu0 0.0
    %1474 = vmatpush1.msra.mxu0 0.0
    %1475 = vmatprep.subr.mxu0 0.0
    %1476 = vmatpush1.msra.mxu0 0.0
    %1477 = vmatprep.subr.mxu0 0.0
    %1478 = vmatpush1.msra.mxu0 0.0
    %1479 = vmatprep.subr.mxu0 0.0
    %1480 = vmatpush1.msra.mxu0 0.0
    %1481 = vmatprep.subr.mxu0 0.0
    %1482 = vmatpush1.msra.mxu0 0.0
    %1483 = vmatprep.subr.mxu0 0.0
    %1484 = vmatpush1.msra.mxu0 0.0
    %1485 = vmatprep.subr.mxu0 0.0
    %1486 = vmatpush1.msra.mxu0 0.0
    %1487 = vmatprep.subr.mxu0 0.0
    %1488 = vmatpush1.msra.mxu0 0.0
    %1489 = vmatprep.subr.mxu0 0.0
    %1490 = vmatpush1.msra.mxu0 0.0
    %1491 = vmatprep.subr.mxu0 0.0
    %1492 = vmatpush1.msra.mxu0 0.0
    %1493 = vmatprep.subr.mxu0 0.0
    %1494 = vmatpush1.msra.mxu0 0.0
    %1495 = vmatprep.subr.mxu0 0.0
    %1496 = vmatpush1.msra.mxu0 0.0
    %1497 = vmatprep.subr.mxu0 0.0
    %1498 = vmatpush1.msra.mxu0 0.0
    %1499 = vmatprep.subr.mxu0 0.0
    %1500 = vmatpush1.msra.mxu0 0.0
    %1501 = vmatprep.subr.mxu0 0.0
    %1502 = vmatpush1.msra.mxu0 0.0
    %1503 = vmatprep.subr.mxu0 0.0
    %1504 = vmatpush1.msra.mxu0 0.0
    %1505 = vmatprep.subr.mxu0 0.0
    %1506 = vmatpush1.msra.mxu0 0.0
    %1507 = vmatprep.subr.mxu0 0.0
    %1508 = vmatpush1.msra.mxu0 0.0
    %1509 = vmatprep.subr.mxu0 0.0
    %1510 = vmatpush1.msra.mxu0 0.0
    %1511 = vmatprep.subr.mxu0 0.0
    %1512 = vmatpush1.msra.mxu0 0.0
    %1513 = vmatprep.subr.mxu0 0.0
    %1514 = vmatpush1.msra.mxu0 0.0
    %1515 = vmatprep.mubr.f32.mxu0 0.0
    %1516 = vmatmul.mubr.f32.gmra.mrb[0].mxu0 %v1449
    %v1517 = vpop.f32.mrb[0].mxu0
    %v1518 = vadd.f32 %v1444, %v1517
    %v1519 = vpop.f32.mrb[0].mxu0
    %1520 = vdwg.mxu0
    %1521 = vst.msk [vmem:[#allocation4] sm:$0x3] %vm45, %v1518
    // Predicated region
    $region38: #{cnn_lstm_forward.1} parent=1 // pred_check
      _
    $region39: #{cnn_lstm_forward.1} parent=1 // pred_check_branch
      %1523 = sbr.rel (0) target = $region41
    $region40: #{cnn_lstm_forward.1} parent=1 // pred_region
      _
    $region41: #{cnn_lstm_forward.1} parent=1 // pred_fallthru
      _
    // Predicated region
    $region42: #{cnn_lstm_forward.1} parent=1 // pred_check
      _
    $region43: #{cnn_lstm_forward.1} parent=1 // pred_check_branch
      %1525 = sbr.rel (0) target = $region45
    $region44: #{cnn_lstm_forward.1} parent=1 // pred_region
      %s1527 = ssub.s32 32, 32
      %1528 = vsyncadd [#allocation5], %s1527
      %s1530 = sshll.u32 [#allocation4], 4
      %s1531 = int_to_ptr.vmem [resolvable:$true] %s1530
      %1533 = dma.vmem_to_hbm [thread:$0]  %s1531, 32, %s10, [#allocation5]
    $region45: #{cnn_lstm_forward.1} parent=1 // pred_fallthru
      _
    // Predicated region
    $region46: #{cnn_lstm_forward.1} parent=1 // pred_check
      _
    $region47: #{cnn_lstm_forward.1} parent=1 // pred_check_branch
      %1535 = sbr.rel (0) target = $region49
    $region48: #{cnn_lstm_forward.1} parent=1 // pred_region
      _
    $region49: #{cnn_lstm_forward.1} parent=1 // pred_fallthru
      _
    // Predicated region
    $region50: #{cnn_lstm_forward.1} parent=1 // pred_check
      _
    $region51: #{cnn_lstm_forward.1} parent=1 // pred_check_branch
      %1537 = sbr.rel (0) target = $region53
    $region52: #{cnn_lstm_forward.1} parent=1 // pred_region
      %1538 = dma.done [#allocation5], 32
    $region53: #{cnn_lstm_forward.1} parent=1 // pred_fallthru
      _
    %1539 = vsyncpa [#allocation5], 1

</llo_original>
